<compile_context>
chip_gen: v5e
topology: v5e:2x2
jax: 0.10.0
libtpu: 0.0.40
codegen_flags: <defaults>
</compile_context>

<pallas_src>
import jax
import jax.numpy as jnp
import numpy as np
from jax.experimental import pallas as pl
from jax.experimental.pallas import tpu as pltpu


# ----------------------------------------------------------------------------
# Synthetic hetero graph definition (small, deterministic)
# ----------------------------------------------------------------------------
NTYPES = ["item", "user"]
# canonical relations: (src_ntype, etype, dst_ntype)
CANON = [
    ("item", "bought-by", "user"),
    ("user", "buys", "item"),
    ("user", "follows", "user"),
]
REL_NAMES = sorted({e for _, e, _ in CANON})   # matches sorted(set(g.etypes))
N_NODES = {"item": 16, "user": 16}
IN_DIM, H_DIM, OUT_DIM = 8, 32, 16
NUM_LAYERS = 3
FPAD = 128                                     # lane-dense padded feature width


# ----------------------------------------------------------------------------
# Fused Pallas kernel: entire 3-layer hetero GNN forward, statically unrolled.
# ----------------------------------------------------------------------------
def _fused_hetero_gnn_kernel(a_bb_ref, a_by_ref, a_fo_ref,      # dense right-normalized adjacency
                             h_item_ref, h_user_ref,            # [N, FPAD] padded features
                             wrel_ref,                          # [L, R, FPAD, FPAD]
                             wloop_ref,                          # [L, T, FPAD, FPAD]
                             b_ref,                              # [L, T, 1, FPAD]
                             o_item_ref, o_user_ref):            # [N, FPAD] outputs
    adj = {
        ("item", "bought-by", "user"): a_bb_ref[...],
        ("user", "buys", "item"): a_by_ref[...],
        ("user", "follows", "user"): a_fo_ref[...],
    }
    h = {"item": h_item_ref[...], "user": h_user_ref[...]}

    for layer in range(NUM_LAYERS):
        new_h = {}
        for t_idx, ntype in enumerate(NTYPES):
            # self-loop linear (weight + bias) on the dst features
            acc = jnp.dot(h[ntype], wloop_ref[layer, t_idx],
                          preferred_element_type=jnp.float32)
            acc = acc + b_ref[layer, t_idx]
            # message passing over every canonical relation whose dst is this ntype
            for (src, etype, dst) in CANON:
                if dst != ntype:
                    continue
                r_idx = REL_NAMES.index(etype)
                y = jnp.dot(h[src], wrel_ref[layer, r_idx],
                            preferred_element_type=jnp.float32)
                acc = acc + jnp.dot(adj[(src, etype, dst)], y,
                                    preferred_element_type=jnp.float32)
            if layer < NUM_LAYERS - 1:
                acc = jnp.maximum(acc, 0.0)          # ReLU on layers 0, 1
            new_h[ntype] = acc
        h = new_h

    o_item_ref[...] = h["item"]
    o_user_ref[...] = h["user"]


# ----------------------------------------------------------------------------
# Wrapper: pad/stack params, single pallas_call, slice outputs
# ----------------------------------------------------------------------------
def _pad2(w, rows, cols):
    return jnp.pad(w, ((0, rows - w.shape[0]), (0, cols - w.shape[1])))


def hetero_gnn_forward(adj_norm, h, layer_params_list):
    # Stack + zero-pad all weights once: padded rows/columns are exact zeros, so padded
    # output lanes stay 0 through every layer (incl. ReLU) and are sliced off at the end.
    wrel = jnp.stack([
        jnp.stack([_pad2(p["rel_w"][rel], FPAD, FPAD) for rel in REL_NAMES])
        for p in layer_params_list])                                  # [L, R, FPAD, FPAD]
    wloop = jnp.stack([
        jnp.stack([_pad2(p["loop"][t][0], FPAD, FPAD) for t in NTYPES])
        for p in layer_params_list])                                  # [L, T, FPAD, FPAD]
    bias = jnp.stack([
        jnp.stack([jnp.pad(p["loop"][t][1],
                           (0, FPAD - p["loop"][t][1].shape[0])).reshape(1, FPAD)
                   for t in NTYPES])
        for p in layer_params_list])                                  # [L, T, 1, FPAD]

    h_item = _pad2(h["item"], N_NODES["item"], FPAD)
    h_user = _pad2(h["user"], N_NODES["user"], FPAD)

    vmem_spec = pl.BlockSpec(memory_space=pltpu.MemorySpace.VMEM)
    out_item, out_user = pl.pallas_call(
        _fused_hetero_gnn_kernel,
        out_shape=(jax.ShapeDtypeStruct((N_NODES["item"], FPAD), jnp.float32),
                   jax.ShapeDtypeStruct((N_NODES["user"], FPAD), jnp.float32)),
        in_specs=[vmem_spec] * 8,
        out_specs=(vmem_spec, vmem_spec),
        compiler_params=pltpu.CompilerParams(vmem_limit_bytes=8 << 20),
    )(adj_norm[("item", "bought-by", "user")],
      adj_norm[("user", "buys", "item")],
      adj_norm[("user", "follows", "user")],
      h_item, h_user, wrel, wloop, bias)

    return {"item": out_item[:, :OUT_DIM], "user": out_user[:, :OUT_DIM]}


# ----------------------------------------------------------------------------
# Parameter / graph construction (plain JAX glue)
# ----------------------------------------------------------------------------
def make_adjacency(key):
    """Dense binary adjacency per canonical relation, right-normalized
    (aggregated sum divided by per-dst in-degree, clamped to 1)."""
    adj = {}
    for i, (s, e, d) in enumerate(CANON):
        k = jax.random.fold_in(key, i)
        a = jax.random.bernoulli(k, p=0.3, shape=(N_NODES[d], N_NODES[s]))
        a = a.astype(jnp.float32)
        deg = jnp.clip(a.sum(axis=1, keepdims=True), 1.0, None)
        adj[(s, e, d)] = a / deg
    return adj


def make_layer_params(key, fin, fout):
    params = {"rel_w": {}, "loop": {}}
    for i, rel in enumerate(REL_NAMES):
        k = jax.random.fold_in(key, i)
        # nn.Linear(fin, fout, bias=False).weight.T  ->  [fin, fout]
        params["rel_w"][rel] = (
            jax.random.normal(k, (fin, fout), jnp.float32) * (1.0 / np.sqrt(fin))
        )
    for j, ntype in enumerate(NTYPES):
        k = jax.random.fold_in(key, 100 + j)
        kw, kb = jax.random.split(k)
        w = jax.random.normal(kw, (fin, fout), jnp.float32) * (1.0 / np.sqrt(fin))
        b = jax.random.normal(kb, (fout,), jnp.float32) * 0.01
        params["loop"][ntype] = (w, b)
    return params


# Pure-JAX reference of the same math (correctness check).
def ref_layer(adj_norm, h, params, apply_relu):
    out = {}
    for ntype in NTYPES:
        rels = [c for c in CANON if c[2] == ntype]
        if not rels:
            continue
        Wl, b = params["loop"][ntype]
        acc = h[ntype] @ Wl + b
        for (s, e, d) in rels:
            acc = acc + adj_norm[(s, e, d)] @ (h[s] @ params["rel_w"][e])
        if apply_relu:
            acc = jnp.maximum(acc, 0.0)
        out[ntype] = acc
    return out


def ref_forward(adj_norm, h, layer_params_list):
    for li, params in enumerate(layer_params_list):
        h = ref_layer(adj_norm, h, params, li < len(layer_params_list) - 1)
    return h


if __name__ == "__main__":
    root = jax.random.PRNGKey(0)
    k_adj, k_feat, k_p0, k_p1, k_p2 = jax.random.split(root, 5)

    adj_norm = make_adjacency(k_adj)
    h0 = {
        ntype: jax.random.normal(jax.random.fold_in(k_feat, i),
                                 (N_NODES[ntype], IN_DIM), jnp.float32)
        for i, ntype in enumerate(NTYPES)
    }
    layer_params = [
        make_layer_params(k_p0, IN_DIM, H_DIM),
        make_layer_params(k_p1, H_DIM, H_DIM),
        make_layer_params(k_p2, H_DIM, OUT_DIM),
    ]

    out = hetero_gnn_forward(adj_norm, h0, layer_params)
    out = jax.tree_util.tree_map(jax.block_until_ready, out)

    ref = ref_forward(adj_norm, h0, layer_params)
    for ntype in NTYPES:
        np.testing.assert_allclose(np.asarray(out[ntype]), np.asarray(ref[ntype]),
                                   rtol=1e-5, atol=1e-5)
        assert out[ntype].shape == (N_NODES[ntype], OUT_DIM)

    print("KERNEL_OK")
</pallas_src>

<mosaic_0001>
module attributes {stable_mosaic.version = 11 : i64} {
  func.func @_fused_hetero_gnn_kernel(%arg0: memref<16x16xf32, #tpu.memory_space<vmem>>, %arg1: memref<16x16xf32, #tpu.memory_space<vmem>>, %arg2: memref<16x16xf32, #tpu.memory_space<vmem>>, %arg3: memref<16x128xf32, #tpu.memory_space<vmem>>, %arg4: memref<16x128xf32, #tpu.memory_space<vmem>>, %arg5: memref<3x3x128x128xf32, #tpu.memory_space<vmem>>, %arg6: memref<3x2x128x128xf32, #tpu.memory_space<vmem>>, %arg7: memref<3x2x1x128xf32, #tpu.memory_space<vmem>>, %arg8: memref<16x128xf32, #tpu.memory_space<vmem>>, %arg9: memref<16x128xf32, #tpu.memory_space<vmem>>) attributes {dimension_semantics = [], scalar_prefetch = 0 : i64, scratch_operands = 0 : i64, tpu.core_type = #tpu.core_type<tc>} {
    %c0 = arith.constant 0 : index
    %c0_0 = arith.constant 0 : index
    %0 = vector.load %arg0[%c0, %c0_0] : memref<16x16xf32, #tpu.memory_space<vmem>>, vector<16x16xf32>
    %c0_1 = arith.constant 0 : index
    %c0_2 = arith.constant 0 : index
    %1 = vector.load %arg1[%c0_1, %c0_2] : memref<16x16xf32, #tpu.memory_space<vmem>>, vector<16x16xf32>
    %c0_3 = arith.constant 0 : index
    %c0_4 = arith.constant 0 : index
    %2 = vector.load %arg2[%c0_3, %c0_4] : memref<16x16xf32, #tpu.memory_space<vmem>>, vector<16x16xf32>
    %c0_5 = arith.constant 0 : index
    %c0_6 = arith.constant 0 : index
    %3 = vector.load %arg3[%c0_5, %c0_6] : memref<16x128xf32, #tpu.memory_space<vmem>>, vector<16x128xf32>
    %c0_7 = arith.constant 0 : index
    %c0_8 = arith.constant 0 : index
    %4 = vector.load %arg4[%c0_7, %c0_8] : memref<16x128xf32, #tpu.memory_space<vmem>>, vector<16x128xf32>
    %c0_9 = arith.constant 0 : index
    %c0_10 = arith.constant 0 : index
    %c0_11 = arith.constant 0 : index
    %c0_12 = arith.constant 0 : index
    %5 = vector.load %arg6[%c0_9, %c0_10, %c0_11, %c0_12] : memref<3x2x128x128xf32, #tpu.memory_space<vmem>>, vector<1x1x128x128xf32>
    %6 = vector.shape_cast %5 : vector<1x1x128x128xf32> to vector<128x128xf32>
    %cst = arith.constant dense<0.000000e+00> : vector<16x128xf32>
    %7 = tpu.matmul %3, %6, %cst {dimension_numbers = #tpu.dot_dimension_numbers<[1], [0], [0], [1], [0, 0, 1, 1], [], []>} : vector<16x128xf32>, vector<128x128xf32>, vector<16x128xf32> -> vector<16x128xf32>
    %c0_13 = arith.constant 0 : index
    %c0_14 = arith.constant 0 : index
    %c0_15 = arith.constant 0 : index
    %c0_16 = arith.constant 0 : index
    %8 = vector.load %arg7[%c0_13, %c0_14, %c0_15, %c0_16] : memref<3x2x1x128xf32, #tpu.memory_space<vmem>>, vector<1x1x1x128xf32>
    %9 = vector.shape_cast %8 : vector<1x1x1x128xf32> to vector<1x128xf32>
    %10 = vector.broadcast %9 : vector<1x128xf32> to vector<16x128xf32>
    %11 = arith.addf %7, %10 : vector<16x128xf32>
    %c0_17 = arith.constant 0 : index
    %c1 = arith.constant 1 : index
    %c0_18 = arith.constant 0 : index
    %c0_19 = arith.constant 0 : index
    %12 = vector.load %arg5[%c0_17, %c1, %c0_18, %c0_19] : memref<3x3x128x128xf32, #tpu.memory_space<vmem>>, vector<1x1x128x128xf32>
    %13 = vector.shape_cast %12 : vector<1x1x128x128xf32> to vector<128x128xf32>
    %cst_20 = arith.constant dense<0.000000e+00> : vector<16x128xf32>
    %14 = tpu.matmul %4, %13, %cst_20 {dimension_numbers = #tpu.dot_dimension_numbers<[1], [0], [0], [1], [0, 0, 1, 1], [], []>} : vector<16x128xf32>, vector<128x128xf32>, vector<16x128xf32> -> vector<16x128xf32>
    %cst_21 = arith.constant dense<0.000000e+00> : vector<16x128xf32>
    %15 = tpu.matmul %1, %14, %cst_21 {dimension_numbers = #tpu.dot_dimension_numbers<[1], [0], [0], [1], [0, 0, 1, 1], [], []>} : vector<16x16xf32>, vector<16x128xf32>, vector<16x128xf32> -> vector<16x128xf32>
    %16 = arith.addf %11, %15 : vector<16x128xf32>
    %cst_22 = arith.constant 0.000000e+00 : f32
    %17 = vector.broadcast %cst_22 : f32 to vector<16x128xf32>
    %18 = arith.maximumf %16, %17 : vector<16x128xf32>
    %c0_23 = arith.constant 0 : index
    %c1_24 = arith.constant 1 : index
    %c0_25 = arith.constant 0 : index
    %c0_26 = arith.constant 0 : index
    %19 = vector.load %arg6[%c0_23, %c1_24, %c0_25, %c0_26] : memref<3x2x128x128xf32, #tpu.memory_space<vmem>>, vector<1x1x128x128xf32>
    %20 = vector.shape_cast %19 : vector<1x1x128x128xf32> to vector<128x128xf32>
    %cst_27 = arith.constant dense<0.000000e+00> : vector<16x128xf32>
    %21 = tpu.matmul %4, %20, %cst_27 {dimension_numbers = #tpu.dot_dimension_numbers<[1], [0], [0], [1], [0, 0, 1, 1], [], []>} : vector<16x128xf32>, vector<128x128xf32>, vector<16x128xf32> -> vector<16x128xf32>
    %c0_28 = arith.constant 0 : index
    %c1_29 = arith.constant 1 : index
    %c0_30 = arith.constant 0 : index
    %c0_31 = arith.constant 0 : index
    %22 = vector.load %arg7[%c0_28, %c1_29, %c0_30, %c0_31] : memref<3x2x1x128xf32, #tpu.memory_space<vmem>>, vector<1x1x1x128xf32>
    %23 = vector.shape_cast %22 : vector<1x1x1x128xf32> to vector<1x128xf32>
    %24 = vector.broadcast %23 : vector<1x128xf32> to vector<16x128xf32>
    %25 = arith.addf %21, %24 : vector<16x128xf32>
    %c0_32 = arith.constant 0 : index
    %c0_33 = arith.constant 0 : index
    %c0_34 = arith.constant 0 : index
    %c0_35 = arith.constant 0 : index
    %26 = vector.load %arg5[%c0_32, %c0_33, %c0_34, %c0_35] : memref<3x3x128x128xf32, #tpu.memory_space<vmem>>, vector<1x1x128x128xf32>
    %27 = vector.shape_cast %26 : vector<1x1x128x128xf32> to vector<128x128xf32>
    %cst_36 = arith.constant dense<0.000000e+00> : vector<16x128xf32>
    %28 = tpu.matmul %3, %27, %cst_36 {dimension_numbers = #tpu.dot_dimension_numbers<[1], [0], [0], [1], [0, 0, 1, 1], [], []>} : vector<16x128xf32>, vector<128x128xf32>, vector<16x128xf32> -> vector<16x128xf32>
    %cst_37 = arith.constant dense<0.000000e+00> : vector<16x128xf32>
    %29 = tpu.matmul %0, %28, %cst_37 {dimension_numbers = #tpu.dot_dimension_numbers<[1], [0], [0], [1], [0, 0, 1, 1], [], []>} : vector<16x16xf32>, vector<16x128xf32>, vector<16x128xf32> -> vector<16x128xf32>
    %30 = arith.addf %25, %29 : vector<16x128xf32>
    %c0_38 = arith.constant 0 : index
    %c2 = arith.constant 2 : index
    %c0_39 = arith.constant 0 : index
    %c0_40 = arith.constant 0 : index
    %31 = vector.load %arg5[%c0_38, %c2, %c0_39, %c0_40] : memref<3x3x128x128xf32, #tpu.memory_space<vmem>>, vector<1x1x128x128xf32>
    %32 = vector.shape_cast %31 : vector<1x1x128x128xf32> to vector<128x128xf32>
    %cst_41 = arith.constant dense<0.000000e+00> : vector<16x128xf32>
    %33 = tpu.matmul %4, %32, %cst_41 {dimension_numbers = #tpu.dot_dimension_numbers<[1], [0], [0], [1], [0, 0, 1, 1], [], []>} : vector<16x128xf32>, vector<128x128xf32>, vector<16x128xf32> -> vector<16x128xf32>
    %cst_42 = arith.constant dense<0.000000e+00> : vector<16x128xf32>
    %34 = tpu.matmul %2, %33, %cst_42 {dimension_numbers = #tpu.dot_dimension_numbers<[1], [0], [0], [1], [0, 0, 1, 1], [], []>} : vector<16x16xf32>, vector<16x128xf32>, vector<16x128xf32> -> vector<16x128xf32>
    %35 = arith.addf %30, %34 : vector<16x128xf32>
    %cst_43 = arith.constant 0.000000e+00 : f32
    %36 = vector.broadcast %cst_43 : f32 to vector<16x128xf32>
    %37 = arith.maximumf %35, %36 : vector<16x128xf32>
    %c1_44 = arith.constant 1 : index
    %c0_45 = arith.constant 0 : index
    %c0_46 = arith.constant 0 : index
    %c0_47 = arith.constant 0 : index
    %38 = vector.load %arg6[%c1_44, %c0_45, %c0_46, %c0_47] : memref<3x2x128x128xf32, #tpu.memory_space<vmem>>, vector<1x1x128x128xf32>
    %39 = vector.shape_cast %38 : vector<1x1x128x128xf32> to vector<128x128xf32>
    %cst_48 = arith.constant dense<0.000000e+00> : vector<16x128xf32>
    %40 = tpu.matmul %18, %39, %cst_48 {dimension_numbers = #tpu.dot_dimension_numbers<[1], [0], [0], [1], [0, 0, 1, 1], [], []>} : vector<16x128xf32>, vector<128x128xf32>, vector<16x128xf32> -> vector<16x128xf32>
    %c1_49 = arith.constant 1 : index
    %c0_50 = arith.constant 0 : index
    %c0_51 = arith.constant 0 : index
    %c0_52 = arith.constant 0 : index
    %41 = vector.load %arg7[%c1_49, %c0_50, %c0_51, %c0_52] : memref<3x2x1x128xf32, #tpu.memory_space<vmem>>, vector<1x1x1x128xf32>
    %42 = vector.shape_cast %41 : vector<1x1x1x128xf32> to vector<1x128xf32>
    %43 = vector.broadcast %42 : vector<1x128xf32> to vector<16x128xf32>
    %44 = arith.addf %40, %43 : vector<16x128xf32>
    %c1_53 = arith.constant 1 : index
    %c1_54 = arith.constant 1 : index
    %c0_55 = arith.constant 0 : index
    %c0_56 = arith.constant 0 : index
    %45 = vector.load %arg5[%c1_53, %c1_54, %c0_55, %c0_56] : memref<3x3x128x128xf32, #tpu.memory_space<vmem>>, vector<1x1x128x128xf32>
    %46 = vector.shape_cast %45 : vector<1x1x128x128xf32> to vector<128x128xf32>
    %cst_57 = arith.constant dense<0.000000e+00> : vector<16x128xf32>
    %47 = tpu.matmul %37, %46, %cst_57 {dimension_numbers = #tpu.dot_dimension_numbers<[1], [0], [0], [1], [0, 0, 1, 1], [], []>} : vector<16x128xf32>, vector<128x128xf32>, vector<16x128xf32> -> vector<16x128xf32>
    %cst_58 = arith.constant dense<0.000000e+00> : vector<16x128xf32>
    %48 = tpu.matmul %1, %47, %cst_58 {dimension_numbers = #tpu.dot_dimension_numbers<[1], [0], [0], [1], [0, 0, 1, 1], [], []>} : vector<16x16xf32>, vector<16x128xf32>, vector<16x128xf32> -> vector<16x128xf32>
    %49 = arith.addf %44, %48 : vector<16x128xf32>
    %cst_59 = arith.constant 0.000000e+00 : f32
    %50 = vector.broadcast %cst_59 : f32 to vector<16x128xf32>
    %51 = arith.maximumf %49, %50 : vector<16x128xf32>
    %c1_60 = arith.constant 1 : index
    %c1_61 = arith.constant 1 : index
    %c0_62 = arith.constant 0 : index
    %c0_63 = arith.constant 0 : index
    %52 = vector.load %arg6[%c1_60, %c1_61, %c0_62, %c0_63] : memref<3x2x128x128xf32, #tpu.memory_space<vmem>>, vector<1x1x128x128xf32>
    %53 = vector.shape_cast %52 : vector<1x1x128x128xf32> to vector<128x128xf32>
    %cst_64 = arith.constant dense<0.000000e+00> : vector<16x128xf32>
    %54 = tpu.matmul %37, %53, %cst_64 {dimension_numbers = #tpu.dot_dimension_numbers<[1], [0], [0], [1], [0, 0, 1, 1], [], []>} : vector<16x128xf32>, vector<128x128xf32>, vector<16x128xf32> -> vector<16x128xf32>
    %c1_65 = arith.constant 1 : index
    %c1_66 = arith.constant 1 : index
    %c0_67 = arith.constant 0 : index
    %c0_68 = arith.constant 0 : index
    %55 = vector.load %arg7[%c1_65, %c1_66, %c0_67, %c0_68] : memref<3x2x1x128xf32, #tpu.memory_space<vmem>>, vector<1x1x1x128xf32>
    %56 = vector.shape_cast %55 : vector<1x1x1x128xf32> to vector<1x128xf32>
    %57 = vector.broadcast %56 : vector<1x128xf32> to vector<16x128xf32>
    %58 = arith.addf %54, %57 : vector<16x128xf32>
    %c1_69 = arith.constant 1 : index
    %c0_70 = arith.constant 0 : index
    %c0_71 = arith.constant 0 : index
    %c0_72 = arith.constant 0 : index
    %59 = vector.load %arg5[%c1_69, %c0_70, %c0_71, %c0_72] : memref<3x3x128x128xf32, #tpu.memory_space<vmem>>, vector<1x1x128x128xf32>
    %60 = vector.shape_cast %59 : vector<1x1x128x128xf32> to vector<128x128xf32>
    %cst_73 = arith.constant dense<0.000000e+00> : vector<16x128xf32>
    %61 = tpu.matmul %18, %60, %cst_73 {dimension_numbers = #tpu.dot_dimension_numbers<[1], [0], [0], [1], [0, 0, 1, 1], [], []>} : vector<16x128xf32>, vector<128x128xf32>, vector<16x128xf32> -> vector<16x128xf32>
    %cst_74 = arith.constant dense<0.000000e+00> : vector<16x128xf32>
    %62 = tpu.matmul %0, %61, %cst_74 {dimension_numbers = #tpu.dot_dimension_numbers<[1], [0], [0], [1], [0, 0, 1, 1], [], []>} : vector<16x16xf32>, vector<16x128xf32>, vector<16x128xf32> -> vector<16x128xf32>
    %63 = arith.addf %58, %62 : vector<16x128xf32>
    %c1_75 = arith.constant 1 : index
    %c2_76 = arith.constant 2 : index
    %c0_77 = arith.constant 0 : index
    %c0_78 = arith.constant 0 : index
    %64 = vector.load %arg5[%c1_75, %c2_76, %c0_77, %c0_78] : memref<3x3x128x128xf32, #tpu.memory_space<vmem>>, vector<1x1x128x128xf32>
    %65 = vector.shape_cast %64 : vector<1x1x128x128xf32> to vector<128x128xf32>
    %cst_79 = arith.constant dense<0.000000e+00> : vector<16x128xf32>
    %66 = tpu.matmul %37, %65, %cst_79 {dimension_numbers = #tpu.dot_dimension_numbers<[1], [0], [0], [1], [0, 0, 1, 1], [], []>} : vector<16x128xf32>, vector<128x128xf32>, vector<16x128xf32> -> vector<16x128xf32>
    %cst_80 = arith.constant dense<0.000000e+00> : vector<16x128xf32>
    %67 = tpu.matmul %2, %66, %cst_80 {dimension_numbers = #tpu.dot_dimension_numbers<[1], [0], [0], [1], [0, 0, 1, 1], [], []>} : vector<16x16xf32>, vector<16x128xf32>, vector<16x128xf32> -> vector<16x128xf32>
    %68 = arith.addf %63, %67 : vector<16x128xf32>
    %cst_81 = arith.constant 0.000000e+00 : f32
    %69 = vector.broadcast %cst_81 : f32 to vector<16x128xf32>
    %70 = arith.maximumf %68, %69 : vector<16x128xf32>
    %c2_82 = arith.constant 2 : index
    %c0_83 = arith.constant 0 : index
    %c0_84 = arith.constant 0 : index
    %c0_85 = arith.constant 0 : index
    %71 = vector.load %arg6[%c2_82, %c0_83, %c0_84, %c0_85] : memref<3x2x128x128xf32, #tpu.memory_space<vmem>>, vector<1x1x128x128xf32>
    %72 = vector.shape_cast %71 : vector<1x1x128x128xf32> to vector<128x128xf32>
    %cst_86 = arith.constant dense<0.000000e+00> : vector<16x128xf32>
    %73 = tpu.matmul %51, %72, %cst_86 {dimension_numbers = #tpu.dot_dimension_numbers<[1], [0], [0], [1], [0, 0, 1, 1], [], []>} : vector<16x128xf32>, vector<128x128xf32>, vector<16x128xf32> -> vector<16x128xf32>
    %c2_87 = arith.constant 2 : index
    %c0_88 = arith.constant 0 : index
    %c0_89 = arith.constant 0 : index
    %c0_90 = arith.constant 0 : index
    %74 = vector.load %arg7[%c2_87, %c0_88, %c0_89, %c0_90] : memref<3x2x1x128xf32, #tpu.memory_space<vmem>>, vector<1x1x1x128xf32>
    %75 = vector.shape_cast %74 : vector<1x1x1x128xf32> to vector<1x128xf32>
    %76 = vector.broadcast %75 : vector<1x128xf32> to vector<16x128xf32>
    %77 = arith.addf %73, %76 : vector<16x128xf32>
    %c2_91 = arith.constant 2 : index
    %c1_92 = arith.constant 1 : index
    %c0_93 = arith.constant 0 : index
    %c0_94 = arith.constant 0 : index
    %78 = vector.load %arg5[%c2_91, %c1_92, %c0_93, %c0_94] : memref<3x3x128x128xf32, #tpu.memory_space<vmem>>, vector<1x1x128x128xf32>
    %79 = vector.shape_cast %78 : vector<1x1x128x128xf32> to vector<128x128xf32>
    %cst_95 = arith.constant dense<0.000000e+00> : vector<16x128xf32>
    %80 = tpu.matmul %70, %79, %cst_95 {dimension_numbers = #tpu.dot_dimension_numbers<[1], [0], [0], [1], [0, 0, 1, 1], [], []>} : vector<16x128xf32>, vector<128x128xf32>, vector<16x128xf32> -> vector<16x128xf32>
    %cst_96 = arith.constant dense<0.000000e+00> : vector<16x128xf32>
    %81 = tpu.matmul %1, %80, %cst_96 {dimension_numbers = #tpu.dot_dimension_numbers<[1], [0], [0], [1], [0, 0, 1, 1], [], []>} : vector<16x16xf32>, vector<16x128xf32>, vector<16x128xf32> -> vector<16x128xf32>
    %82 = arith.addf %77, %81 : vector<16x128xf32>
    %c2_97 = arith.constant 2 : index
    %c1_98 = arith.constant 1 : index
    %c0_99 = arith.constant 0 : index
    %c0_100 = arith.constant 0 : index
    %83 = vector.load %arg6[%c2_97, %c1_98, %c0_99, %c0_100] : memref<3x2x128x128xf32, #tpu.memory_space<vmem>>, vector<1x1x128x128xf32>
    %84 = vector.shape_cast %83 : vector<1x1x128x128xf32> to vector<128x128xf32>
    %cst_101 = arith.constant dense<0.000000e+00> : vector<16x128xf32>
    %85 = tpu.matmul %70, %84, %cst_101 {dimension_numbers = #tpu.dot_dimension_numbers<[1], [0], [0], [1], [0, 0, 1, 1], [], []>} : vector<16x128xf32>, vector<128x128xf32>, vector<16x128xf32> -> vector<16x128xf32>
    %c2_102 = arith.constant 2 : index
    %c1_103 = arith.constant 1 : index
    %c0_104 = arith.constant 0 : index
    %c0_105 = arith.constant 0 : index
    %86 = vector.load %arg7[%c2_102, %c1_103, %c0_104, %c0_105] : memref<3x2x1x128xf32, #tpu.memory_space<vmem>>, vector<1x1x1x128xf32>
    %87 = vector.shape_cast %86 : vector<1x1x1x128xf32> to vector<1x128xf32>
    %88 = vector.broadcast %87 : vector<1x128xf32> to vector<16x128xf32>
    %89 = arith.addf %85, %88 : vector<16x128xf32>
    %c2_106 = arith.constant 2 : index
    %c0_107 = arith.constant 0 : index
    %c0_108 = arith.constant 0 : index
    %c0_109 = arith.constant 0 : index
    %90 = vector.load %arg5[%c2_106, %c0_107, %c0_108, %c0_109] : memref<3x3x128x128xf32, #tpu.memory_space<vmem>>, vector<1x1x128x128xf32>
    %91 = vector.shape_cast %90 : vector<1x1x128x128xf32> to vector<128x128xf32>
    %cst_110 = arith.constant dense<0.000000e+00> : vector<16x128xf32>
    %92 = tpu.matmul %51, %91, %cst_110 {dimension_numbers = #tpu.dot_dimension_numbers<[1], [0], [0], [1], [0, 0, 1, 1], [], []>} : vector<16x128xf32>, vector<128x128xf32>, vector<16x128xf32> -> vector<16x128xf32>
    %cst_111 = arith.constant dense<0.000000e+00> : vector<16x128xf32>
    %93 = tpu.matmul %0, %92, %cst_111 {dimension_numbers = #tpu.dot_dimension_numbers<[1], [0], [0], [1], [0, 0, 1, 1], [], []>} : vector<16x16xf32>, vector<16x128xf32>, vector<16x128xf32> -> vector<16x128xf32>
    %94 = arith.addf %89, %93 : vector<16x128xf32>
    %c2_112 = arith.constant 2 : index
    %c2_113 = arith.constant 2 : index
    %c0_114 = arith.constant 0 : index
    %c0_115 = arith.constant 0 : index
    %95 = vector.load %arg5[%c2_112, %c2_113, %c0_114, %c0_115] : memref<3x3x128x128xf32, #tpu.memory_space<vmem>>, vector<1x1x128x128xf32>
    %96 = vector.shape_cast %95 : vector<1x1x128x128xf32> to vector<128x128xf32>
    %cst_116 = arith.constant dense<0.000000e+00> : vector<16x128xf32>
    %97 = tpu.matmul %70, %96, %cst_116 {dimension_numbers = #tpu.dot_dimension_numbers<[1], [0], [0], [1], [0, 0, 1, 1], [], []>} : vector<16x128xf32>, vector<128x128xf32>, vector<16x128xf32> -> vector<16x128xf32>
    %cst_117 = arith.constant dense<0.000000e+00> : vector<16x128xf32>
    %98 = tpu.matmul %2, %97, %cst_117 {dimension_numbers = #tpu.dot_dimension_numbers<[1], [0], [0], [1], [0, 0, 1, 1], [], []>} : vector<16x16xf32>, vector<16x128xf32>, vector<16x128xf32> -> vector<16x128xf32>
    %99 = arith.addf %94, %98 : vector<16x128xf32>
    %c0_118 = arith.constant 0 : index
    %c0_119 = arith.constant 0 : index
    %100 = vector.load %arg8[%c0_118, %c0_119] : memref<16x128xf32, #tpu.memory_space<vmem>>, vector<16x128xf32>
    tpu.vector_store %arg8[%c0_118, %c0_119], %82 {strides = array<i32>} : memref<16x128xf32, #tpu.memory_space<vmem>>, vector<16x128xf32>,
    %c0_120 = arith.constant 0 : index
    %c0_121 = arith.constant 0 : index
    %101 = vector.load %arg9[%c0_120, %c0_121] : memref<16x128xf32, #tpu.memory_space<vmem>>, vector<16x128xf32>
    tpu.vector_store %arg9[%c0_120, %c0_121], %99 {strides = array<i32>} : memref<16x128xf32, #tpu.memory_space<vmem>>, vector<16x128xf32>,
    return
  }
}

</mosaic_0001>

<llo_original>
// kernel: tpu_custom_call.1
$region0: #{tpu_custom_call.1}
  #allocation0 [shape = 'u32[]', space=smem, size = 0x4, offset = 0x4, fixed_abs, tag = 'smem constant byte address 0x4 - core index']
  #allocation1 [shape = 'u32[72,128]{1,0:T(1,128)}', space=vmem, size = 0x9000, scoped, tag = 'internal scratch']
  %s0 = inlined_call_operand.hbm [shape: f32[16,16], index: 0, kind: input, shape index: {}]
  %s1 = inlined_call_operand.hbm [shape: f32[16,16], index: 1, kind: input, shape index: {}]
  %s2 = inlined_call_operand.hbm [shape: f32[16,16], index: 2, kind: input, shape index: {}]
  %s3 = inlined_call_operand.hbm [shape: f32[16,128], index: 3, kind: input, shape index: {}]
  %s4 = inlined_call_operand.hbm [shape: f32[16,128], index: 4, kind: input, shape index: {}]
  %s5 = inlined_call_operand.hbm [shape: f32[3,3,128,128], index: 5, kind: input, shape index: {}]
  %s6 = inlined_call_operand.hbm [shape: f32[3,2,128,128], index: 6, kind: input, shape index: {}]
  %s7 = inlined_call_operand.vmem [shape: f32[3,2,1,128], index: 7, kind: input, shape index: {}]
  %s8 = inlined_call_operand.hbm [shape: f32[16,128], index: 8, kind: output, shape index: {0}]
  %s9 = inlined_call_operand.hbm [shape: f32[16,128], index: 9, kind: output, shape index: {1}]
  %10 = xla_tuple %s8, %s9
  %s11 = sld [smem:[#allocation0]]
  $region78: #{tpu_custom_call.1} parent=0
    _
  %s13 = ssub.s32 1, %s11
  %s14 = scalar_select 0, %s13, %s11
  $region1: #{tpu_custom_call.1} parent=0
    #allocation2 [shape = 'u8[8192]{0}', space=vmem, size = 0x2000, scoped, tag = 'input window, operand 0, single buffered']
    #allocation3 [shape = 's32[1]{0}', space=sflag, size = 0x4, scoped, tag = 'scoped memory for tpu_custom_call.1']
    #allocation4 [shape = 's32[1]{0}', space=sflag, size = 0x4, scoped, tag = 'scoped memory for tpu_custom_call.1']
    #allocation5 [shape = 'u8[8192]{0}', space=vmem, size = 0x2000, scoped, tag = 'input window, operand 1, single buffered']
    #allocation6 [shape = 's32[1]{0}', space=sflag, size = 0x4, scoped, tag = 'scoped memory for tpu_custom_call.1']
    #allocation7 [shape = 'u8[8192]{0}', space=vmem, size = 0x2000, scoped, tag = 'input window, operand 2, single buffered']
    #allocation8 [shape = 'u8[8192]{0}', space=vmem, size = 0x2000, scoped, tag = 'input window, operand 3, single buffered']
    #allocation9 [shape = 's32[1]{0}', space=sflag, size = 0x4, scoped, tag = 'scoped memory for tpu_custom_call.1']
    #allocation10 [shape = 'u8[8192]{0}', space=vmem, size = 0x2000, scoped, tag = 'input window, operand 4, single buffered']
    #allocation11 [shape = 'u8[589824]{0}', space=vmem, size = 0x90000, scoped, tag = 'input window, operand 5, single buffered']
    #allocation12 [shape = 's32[1]{0}', space=sflag, size = 0x4, scoped, tag = 'scoped memory for tpu_custom_call.1']
    #allocation13 [shape = 'u8[393216]{0}', space=vmem, size = 0x60000, scoped, tag = 'input window, operand 6, single buffered']
    #allocation14 [shape = 'u8[8192]{0}', space=vmem, size = 0x2000, scoped, tag = 'output window, operand 0, single buffered']
    #allocation15 [shape = 'u8[8192]{0}', space=vmem, size = 0x2000, scoped, tag = 'output window, operand 1, single buffered']
    #allocation16 [shape = 's32[1]{0}', space=sflag, size = 0x4, scoped, tag = 'scoped memory for tpu_custom_call.1']
    %15 = vsyncpa [#allocation3], 0
    %16 = vsyncpa [#allocation6], 0
    %17 = vsyncpa [#allocation9], 0
    %18 = vsyncpa [#allocation12], 0
    %19 = vsyncpa [#allocation4], 0
    %20 = vsyncpa [#allocation16], 0
    // Predicated region
    $region2: #{tpu_custom_call.1} parent=1 // pred_check
      _
    $region3: #{tpu_custom_call.1} parent=1 // pred_check_branch
      %22 = sbr.rel (0) target = $region5
    $region4: #{tpu_custom_call.1} parent=1 // pred_region
      %24 = vsyncadd [#allocation3], 0
      %s25 = sshll.u32 %s0, 4
      %s26 = int_to_ptr.hbm [resolvable:$true] %s25
      %s27 = sshll.u32 [#allocation2], 4
      %s28 = int_to_ptr.vmem [resolvable:$true] %s27
      %33 = dma.hbm_to_vmem [thread:$0]  %s26, 256, %s28, [#allocation3], 128, 128, 8
    $region5: #{tpu_custom_call.1} parent=1 // pred_fallthru
      _
    // Predicated region
    $region6: #{tpu_custom_call.1} parent=1 // pred_check
      _
    $region7: #{tpu_custom_call.1} parent=1 // pred_check_branch
      %35 = sbr.rel (0) target = $region9
    $region8: #{tpu_custom_call.1} parent=1 // pred_region
      %37 = vsyncadd [#allocation6], 0
      %s38 = sshll.u32 %s1, 4
      %s39 = int_to_ptr.hbm [resolvable:$true] %s38
      %s40 = sshll.u32 [#allocation5], 4
      %s41 = int_to_ptr.vmem [resolvable:$true] %s40
      %46 = dma.hbm_to_vmem [thread:$0]  %s39, 256, %s41, [#allocation6], 128, 128, 8
    $region9: #{tpu_custom_call.1} parent=1 // pred_fallthru
      _
    // Predicated region
    $region10: #{tpu_custom_call.1} parent=1 // pred_check
      _
    $region11: #{tpu_custom_call.1} parent=1 // pred_check_branch
      %48 = sbr.rel (0) target = $region13
    $region12: #{tpu_custom_call.1} parent=1 // pred_region
      %50 = vsyncadd [#allocation6], 0
      %s51 = sshll.u32 %s2, 4
      %s52 = int_to_ptr.hbm [resolvable:$true] %s51
      %s53 = sshll.u32 [#allocation7], 4
      %s54 = int_to_ptr.vmem [resolvable:$true] %s53
      %59 = dma.hbm_to_vmem [thread:$0]  %s52, 256, %s54, [#allocation6], 128, 128, 8
    $region13: #{tpu_custom_call.1} parent=1 // pred_fallthru
      _
    // Predicated region
    $region14: #{tpu_custom_call.1} parent=1 // pred_check
      _
    $region15: #{tpu_custom_call.1} parent=1 // pred_check_branch
      %61 = sbr.rel (0) target = $region17
    $region16: #{tpu_custom_call.1} parent=1 // pred_region
      %63 = vsyncadd [#allocation9], 0
      %s64 = sshll.u32 %s3, 4
      %s65 = int_to_ptr.hbm [resolvable:$true] %s64
      %s66 = sshll.u32 [#allocation8], 4
      %s67 = int_to_ptr.vmem [resolvable:$true] %s66
      %72 = dma.hbm_to_vmem [thread:$0]  %s65, 256, %s67, [#allocation9], 128, 128, 8
    $region17: #{tpu_custom_call.1} parent=1 // pred_fallthru
      _
    // Predicated region
    $region18: #{tpu_custom_call.1} parent=1 // pred_check
      _
    $region19: #{tpu_custom_call.1} parent=1 // pred_check_branch
      %74 = sbr.rel (0) target = $region21
    $region20: #{tpu_custom_call.1} parent=1 // pred_region
      %76 = vsyncadd [#allocation9], 0
      %s77 = sshll.u32 %s4, 4
      %s78 = int_to_ptr.hbm [resolvable:$true] %s77
      %s79 = sshll.u32 [#allocation10], 4
      %s80 = int_to_ptr.vmem [resolvable:$true] %s79
      %85 = dma.hbm_to_vmem [thread:$0]  %s78, 256, %s80, [#allocation9], 128, 128, 8
    $region21: #{tpu_custom_call.1} parent=1 // pred_fallthru
      _
    // Predicated region
    $region22: #{tpu_custom_call.1} parent=1 // pred_check
      _
    $region23: #{tpu_custom_call.1} parent=1 // pred_check_branch
      %87 = sbr.rel (0) target = $region25
    $region24: #{tpu_custom_call.1} parent=1 // pred_region
      %89 = vsyncadd [#allocation12], 0
      %s90 = sshll.u32 %s5, 4
      %s91 = int_to_ptr.hbm [resolvable:$true] %s90
      %s92 = sshll.u32 [#allocation11], 4
      %s93 = int_to_ptr.vmem [resolvable:$true] %s92
      %98 = dma.hbm_to_vmem [thread:$0]  %s91, 18432, %s93, [#allocation12], 128, 128, 8
    $region25: #{tpu_custom_call.1} parent=1 // pred_fallthru
      _
    // Predicated region
    $region26: #{tpu_custom_call.1} parent=1 // pred_check
      _
    $region27: #{tpu_custom_call.1} parent=1 // pred_check_branch
      %100 = sbr.rel (0) target = $region29
    $region28: #{tpu_custom_call.1} parent=1 // pred_region
      %102 = vsyncadd [#allocation12], 0
      %s103 = sshll.u32 %s6, 4
      %s104 = int_to_ptr.hbm [resolvable:$true] %s103
      %s105 = sshll.u32 [#allocation13], 4
      %s106 = int_to_ptr.vmem [resolvable:$true] %s105
      %111 = dma.hbm_to_vmem [thread:$0]  %s104, 12288, %s106, [#allocation12], 128, 128, 8
    $region29: #{tpu_custom_call.1} parent=1 // pred_fallthru
      _
    // Predicated region
    $region30: #{tpu_custom_call.1} parent=1 // pred_check
      _
    $region31: #{tpu_custom_call.1} parent=1 // pred_check_branch
      %113 = sbr.rel (0) target = $region33
    $region32: #{tpu_custom_call.1} parent=1 // pred_region
      _
    $region33: #{tpu_custom_call.1} parent=1 // pred_fallthru
      _
    // Predicated region
    $region34: #{tpu_custom_call.1} parent=1 // pred_check
      _
    $region35: #{tpu_custom_call.1} parent=1 // pred_check_branch
      %115 = sbr.rel (0) target = $region37
    $region36: #{tpu_custom_call.1} parent=1 // pred_region
      %117 = dma.done [#allocation3], 256
    $region37: #{tpu_custom_call.1} parent=1 // pred_fallthru
      _
    // Predicated region
    $region38: #{tpu_custom_call.1} parent=1 // pred_check
      _
    $region39: #{tpu_custom_call.1} parent=1 // pred_check_branch
      %119 = sbr.rel (0) target = $region41
    $region40: #{tpu_custom_call.1} parent=1 // pred_region
      %121 = dma.done [#allocation6], 256
    $region41: #{tpu_custom_call.1} parent=1 // pred_fallthru
      _
    // Predicated region
    $region42: #{tpu_custom_call.1} parent=1 // pred_check
      _
    $region43: #{tpu_custom_call.1} parent=1 // pred_check_branch
      %123 = sbr.rel (0) target = $region45
    $region44: #{tpu_custom_call.1} parent=1 // pred_region
      %125 = dma.done [#allocation6], 256
    $region45: #{tpu_custom_call.1} parent=1 // pred_fallthru
      _
    // Predicated region
    $region46: #{tpu_custom_call.1} parent=1 // pred_check
      _
    $region47: #{tpu_custom_call.1} parent=1 // pred_check_branch
      %127 = sbr.rel (0) target = $region49
    $region48: #{tpu_custom_call.1} parent=1 // pred_region
      %129 = dma.done [#allocation9], 256
    $region49: #{tpu_custom_call.1} parent=1 // pred_fallthru
      _
    // Predicated region
    $region50: #{tpu_custom_call.1} parent=1 // pred_check
      _
    $region51: #{tpu_custom_call.1} parent=1 // pred_check_branch
      %131 = sbr.rel (0) target = $region53
    $region52: #{tpu_custom_call.1} parent=1 // pred_region
      %133 = dma.done [#allocation9], 256
    $region53: #{tpu_custom_call.1} parent=1 // pred_fallthru
      _
    // Predicated region
    $region54: #{tpu_custom_call.1} parent=1 // pred_check
      _
    $region55: #{tpu_custom_call.1} parent=1 // pred_check_branch
      %135 = sbr.rel (0) target = $region57
    $region56: #{tpu_custom_call.1} parent=1 // pred_region
      %137 = dma.done [#allocation12], 18432
    $region57: #{tpu_custom_call.1} parent=1 // pred_fallthru
      _
    // Predicated region
    $region58: #{tpu_custom_call.1} parent=1 // pred_check
      _
    $region59: #{tpu_custom_call.1} parent=1 // pred_check_branch
      %139 = sbr.rel (0) target = $region61
    $region60: #{tpu_custom_call.1} parent=1 // pred_region
      %141 = dma.done [#allocation12], 12288
    $region61: #{tpu_custom_call.1} parent=1 // pred_fallthru
      _
    %v142 = vld [vmem:[#allocation2] sm:$0xff]
    %v143 = vld [vmem:[#allocation2 + $0x8] sm:$0xff]
    %v144 = vld [vmem:[#allocation5] sm:$0xff]
    %v145 = vld [vmem:[#allocation5 + $0x8] sm:$0xff]
    %v146 = vld [vmem:[#allocation7] sm:$0xff]
    %v147 = vld [vmem:[#allocation7 + $0x8] sm:$0xff]
    %v148 = vld [vmem:[#allocation8] sm:$0xff]
    %v149 = vld [vmem:[#allocation8 + $0x8] sm:$0xff]
    %v150 = vld [vmem:[#allocation10] sm:$0xff]
    %v151 = vld [vmem:[#allocation10 + $0x8] sm:$0xff]
    %v152 = vld [vmem:[#allocation13] sm:$0xff]
    %v153 = vld [vmem:[#allocation13 + $0x8] sm:$0xff]
    %v154 = vld [vmem:[#allocation13 + $0x10] sm:$0xff]
    %v155 = vld [vmem:[#allocation13 + $0x18] sm:$0xff]
    %v156 = vld [vmem:[#allocation13 + $0x20] sm:$0xff]
    %v157 = vld [vmem:[#allocation13 + $0x28] sm:$0xff]
    %v158 = vld [vmem:[#allocation13 + $0x30] sm:$0xff]
    %v159 = vld [vmem:[#allocation13 + $0x38] sm:$0xff]
    %v160 = vld [vmem:[#allocation13 + $0x40] sm:$0xff]
    %v161 = vld [vmem:[#allocation13 + $0x48] sm:$0xff]
    %v162 = vld [vmem:[#allocation13 + $0x50] sm:$0xff]
    %v163 = vld [vmem:[#allocation13 + $0x58] sm:$0xff]
    %v164 = vld [vmem:[#allocation13 + $0x60] sm:$0xff]
    %v165 = vld [vmem:[#allocation13 + $0x68] sm:$0xff]
    %v166 = vld [vmem:[#allocation13 + $0x70] sm:$0xff]
    %v167 = vld [vmem:[#allocation13 + $0x78] sm:$0xff]
    %v168 = vld [vmem:[%s7] sm:$0x1]
    %v170 = vperm.slane %v168, 0
    %172 = vmatpush.msra.mxu0 %v167
    %173 = vmatpush.msra.mxu0 %v166
    %174 = vmatpush.msra.mxu0 %v165
    %175 = vmatpush.msra.mxu0 %v164
    %176 = vmatpush.msra.mxu0 %v163
    %177 = vmatpush.msra.mxu0 %v162
    %178 = vmatpush.msra.mxu0 %v161
    %179 = vmatpush.msra.mxu0 %v160
    %180 = vmatpush.msra.mxu0 %v159
    %181 = vmatpush.msra.mxu0 %v158
    %182 = vmatpush.msra.mxu0 %v157
    %183 = vmatpush.msra.mxu0 %v156
    %184 = vmatpush.msra.mxu0 %v155
    %185 = vmatpush.msra.mxu0 %v154
    %186 = vmatpush.msra.mxu0 %v153
    %187 = vmatpush.msra.mxu0 %v152
    %188 = vmatmul.f32.gmra.mxu0 %v148
    %v189 = vpop.f32.mrf.mxu0
    %v190 = vadd.f32 %v170, %v189
    %191 = vmatmul.f32.gmra.mxu0 %v149
    %v192 = vpop.f32.mrf.mxu0
    %v193 = vadd.f32 %v170, %v192
    %194 = vdwg.mxu0
    %s195 = scalar_lea.vmem [#allocation11], 128
    %v196 = vld [vmem:[%s195] sm:$0xff]
    %v197 = vld [vmem:[%s195 + $0x8] sm:$0xff]
    %v198 = vld [vmem:[%s195 + $0x10] sm:$0xff]
    %v199 = vld [vmem:[%s195 + $0x18] sm:$0xff]
    %v200 = vld [vmem:[%s195 + $0x20] sm:$0xff]
    %v201 = vld [vmem:[%s195 + $0x28] sm:$0xff]
    %v202 = vld [vmem:[%s195 + $0x30] sm:$0xff]
    %v203 = vld [vmem:[%s195 + $0x38] sm:$0xff]
    %v204 = vld [vmem:[%s195 + $0x40] sm:$0xff]
    %v205 = vld [vmem:[%s195 + $0x48] sm:$0xff]
    %v206 = vld [vmem:[%s195 + $0x50] sm:$0xff]
    %v207 = vld [vmem:[%s195 + $0x58] sm:$0xff]
    %v208 = vld [vmem:[%s195 + $0x60] sm:$0xff]
    %v209 = vld [vmem:[%s195 + $0x68] sm:$0xff]
    %v210 = vld [vmem:[%s195 + $0x70] sm:$0xff]
    %v211 = vld [vmem:[%s195 + $0x78] sm:$0xff]
    %212 = vmatpush.msra.mxu0 %v211
    %213 = vmatpush.msra.mxu0 %v210
    %214 = vmatpush.msra.mxu0 %v209
    %215 = vmatpush.msra.mxu0 %v208
    %216 = vmatpush.msra.mxu0 %v207
    %217 = vmatpush.msra.mxu0 %v206
    %218 = vmatpush.msra.mxu0 %v205
    %219 = vmatpush.msra.mxu0 %v204
    %220 = vmatpush.msra.mxu0 %v203
    %221 = vmatpush.msra.mxu0 %v202
    %222 = vmatpush.msra.mxu0 %v201
    %223 = vmatpush.msra.mxu0 %v200
    %224 = vmatpush.msra.mxu0 %v199
    %225 = vmatpush.msra.mxu0 %v198
    %226 = vmatpush.msra.mxu0 %v197
    %227 = vmatpush.msra.mxu0 %v196
    %228 = vmatmul.f32.gmra.mxu0 %v150
    %v229 = vpop.f32.mrf.mxu0
    %v230 = vadd.f32 0.0, %v229
    %231 = vmatmul.f32.gmra.mxu0 %v151
    %v232 = vpop.f32.mrf.mxu0
    %v233 = vadd.f32 0.0, %v232
    %234 = vdwg.mxu0
    %vm235 = vcmask 130048
    %v237 = vsel %vm235, %v144, 0
    %v240 = vsel %vm235, %v145, 0
    %242 = vmatpush.msra.mxu0 0.0
    %243 = vmatpush.msra.mxu0 0.0
    %244 = vmatpush.msra.mxu0 0.0
    %245 = vmatpush.msra.mxu0 0.0
    %246 = vmatpush.msra.mxu0 0.0
    %247 = vmatpush.msra.mxu0 0.0
    %248 = vmatpush.msra.mxu0 0.0
    %249 = vmatpush.msra.mxu0 0.0
    %250 = vmatpush.msra.mxu0 0.0
    %251 = vmatpush.msra.mxu0 0.0
    %252 = vmatpush.msra.mxu0 0.0
    %253 = vmatpush.msra.mxu0 0.0
    %254 = vmatpush.msra.mxu0 0.0
    %255 = vmatpush.msra.mxu0 0.0
    %256 = vmatpush.msra.mxu0 %v233
    %257 = vmatpush.msra.mxu0 %v230
    %258 = vmatmul.f32.gmra.mxu0 %v237
    %v259 = vpop.f32.mrf.mxu0
    %v260 = vadd.f32 0.0, %v259
    %261 = vmatmul.f32.gmra.mxu0 %v240
    %v262 = vpop.f32.mrf.mxu0
    %v263 = vadd.f32 0.0, %v262
    %264 = vdwg.mxu0
    %v265 = vadd.f32 %v190, %v260
    %v266 = vadd.f32 %v193, %v263
    %v267 = vmax.f32 %v265, 0.0
    %v268 = vmax.f32 %v266, 0.0
    %s269 = scalar_lea.vmem [#allocation13], 128
    %v270 = vld [vmem:[%s269] sm:$0xff]
    %v271 = vld [vmem:[%s269 + $0x8] sm:$0xff]
    %v272 = vld [vmem:[%s269 + $0x10] sm:$0xff]
    %v273 = vld [vmem:[%s269 + $0x18] sm:$0xff]
    %v274 = vld [vmem:[%s269 + $0x20] sm:$0xff]
    %v275 = vld [vmem:[%s269 + $0x28] sm:$0xff]
    %v276 = vld [vmem:[%s269 + $0x30] sm:$0xff]
    %v277 = vld [vmem:[%s269 + $0x38] sm:$0xff]
    %v278 = vld [vmem:[%s269 + $0x40] sm:$0xff]
    %v279 = vld [vmem:[%s269 + $0x48] sm:$0xff]
    %v280 = vld [vmem:[%s269 + $0x50] sm:$0xff]
    %v281 = vld [vmem:[%s269 + $0x58] sm:$0xff]
    %v282 = vld [vmem:[%s269 + $0x60] sm:$0xff]
    %v283 = vld [vmem:[%s269 + $0x68] sm:$0xff]
    %v284 = vld [vmem:[%s269 + $0x70] sm:$0xff]
    %v285 = vld [vmem:[%s269 + $0x78] sm:$0xff]
    %s286 = scalar_lea.vmem %s7, 1
    %v287 = vld [vmem:[%s286] sm:$0x1]
    %v289 = vperm.slane %v287, 0
    %291 = vmatpush.msra.mxu0 %v285
    %292 = vmatpush.msra.mxu0 %v284
    %293 = vmatpush.msra.mxu0 %v283
    %294 = vmatpush.msra.mxu0 %v282
    %295 = vmatpush.msra.mxu0 %v281
    %296 = vmatpush.msra.mxu0 %v280
    %297 = vmatpush.msra.mxu0 %v279
    %298 = vmatpush.msra.mxu0 %v278
    %299 = vmatpush.msra.mxu0 %v277
    %300 = vmatpush.msra.mxu0 %v276
    %301 = vmatpush.msra.mxu0 %v275
    %302 = vmatpush.msra.mxu0 %v274
    %303 = vmatpush.msra.mxu0 %v273
    %304 = vmatpush.msra.mxu0 %v272
    %305 = vmatpush.msra.mxu0 %v271
    %306 = vmatpush.msra.mxu0 %v270
    %307 = vmatmul.f32.gmra.mxu0 %v150
    %v308 = vpop.f32.mrf.mxu0
    %v309 = vadd.f32 %v289, %v308
    %310 = vmatmul.f32.gmra.mxu0 %v151
    %v311 = vpop.f32.mrf.mxu0
    %v312 = vadd.f32 %v289, %v311
    %313 = vdwg.mxu0
    %v314 = vld [vmem:[#allocation11] sm:$0xff]
    %v315 = vld [vmem:[#allocation11 + $0x8] sm:$0xff]
    %v316 = vld [vmem:[#allocation11 + $0x10] sm:$0xff]
    %v317 = vld [vmem:[#allocation11 + $0x18] sm:$0xff]
    %v318 = vld [vmem:[#allocation11 + $0x20] sm:$0xff]
    %v319 = vld [vmem:[#allocation11 + $0x28] sm:$0xff]
    %v320 = vld [vmem:[#allocation11 + $0x30] sm:$0xff]
    %v321 = vld [vmem:[#allocation11 + $0x38] sm:$0xff]
    %v322 = vld [vmem:[#allocation11 + $0x40] sm:$0xff]
    %v323 = vld [vmem:[#allocation11 + $0x48] sm:$0xff]
    %v324 = vld [vmem:[#allocation11 + $0x50] sm:$0xff]
    %v325 = vld [vmem:[#allocation11 + $0x58] sm:$0xff]
    %v326 = vld [vmem:[#allocation11 + $0x60] sm:$0xff]
    %v327 = vld [vmem:[#allocation11 + $0x68] sm:$0xff]
    %v328 = vld [vmem:[#allocation11 + $0x70] sm:$0xff]
    %v329 = vld [vmem:[#allocation11 + $0x78] sm:$0xff]
    %330 = vmatpush.msra.mxu0 %v329
    %331 = vmatpush.msra.mxu0 %v328
    %332 = vmatpush.msra.mxu0 %v327
    %333 = vmatpush.msra.mxu0 %v326
    %334 = vmatpush.msra.mxu0 %v325
    %335 = vmatpush.msra.mxu0 %v324
    %336 = vmatpush.msra.mxu0 %v323
    %337 = vmatpush.msra.mxu0 %v322
    %338 = vmatpush.msra.mxu0 %v321
    %339 = vmatpush.msra.mxu0 %v320
    %340 = vmatpush.msra.mxu0 %v319
    %341 = vmatpush.msra.mxu0 %v318
    %342 = vmatpush.msra.mxu0 %v317
    %343 = vmatpush.msra.mxu0 %v316
    %344 = vmatpush.msra.mxu0 %v315
    %345 = vmatpush.msra.mxu0 %v314
    %346 = vmatmul.f32.gmra.mxu0 %v148
    %v347 = vpop.f32.mrf.mxu0
    %v348 = vadd.f32 0.0, %v347
    %349 = vmatmul.f32.gmra.mxu0 %v149
    %v350 = vpop.f32.mrf.mxu0
    %v351 = vadd.f32 0.0, %v350
    %352 = vdwg.mxu0
    %v354 = vsel %vm235, %v142, 0
    %v357 = vsel %vm235, %v143, 0
    %359 = vmatpush.msra.mxu0 0.0
    %360 = vmatpush.msra.mxu0 0.0
    %361 = vmatpush.msra.mxu0 0.0
    %362 = vmatpush.msra.mxu0 0.0
    %363 = vmatpush.msra.mxu0 0.0
    %364 = vmatpush.msra.mxu0 0.0
    %365 = vmatpush.msra.mxu0 0.0
    %366 = vmatpush.msra.mxu0 0.0
    %367 = vmatpush.msra.mxu0 0.0
    %368 = vmatpush.msra.mxu0 0.0
    %369 = vmatpush.msra.mxu0 0.0
    %370 = vmatpush.msra.mxu0 0.0
    %371 = vmatpush.msra.mxu0 0.0
    %372 = vmatpush.msra.mxu0 0.0
    %373 = vmatpush.msra.mxu0 %v351
    %374 = vmatpush.msra.mxu0 %v348
    %375 = vmatmul.f32.gmra.mxu0 %v354
    %v376 = vpop.f32.mrf.mxu0
    %v377 = vadd.f32 0.0, %v376
    %378 = vmatmul.f32.gmra.mxu0 %v357
    %v379 = vpop.f32.mrf.mxu0
    %v380 = vadd.f32 0.0, %v379
    %381 = vdwg.mxu0
    %v382 = vadd.f32 %v309, %v377
    %v383 = vadd.f32 %v312, %v380
    %s384 = scalar_lea.vmem [#allocation11], 256
    %v385 = vld [vmem:[%s384] sm:$0xff]
    %v386 = vld [vmem:[%s384 + $0x8] sm:$0xff]
    %v387 = vld [vmem:[%s384 + $0x10] sm:$0xff]
    %v388 = vld [vmem:[%s384 + $0x18] sm:$0xff]
    %v389 = vld [vmem:[%s384 + $0x20] sm:$0xff]
    %v390 = vld [vmem:[%s384 + $0x28] sm:$0xff]
    %v391 = vld [vmem:[%s384 + $0x30] sm:$0xff]
    %v392 = vld [vmem:[%s384 + $0x38] sm:$0xff]
    %v393 = vld [vmem:[%s384 + $0x40] sm:$0xff]
    %v394 = vld [vmem:[%s384 + $0x48] sm:$0xff]
    %v395 = vld [vmem:[%s384 + $0x50] sm:$0xff]
    %v396 = vld [vmem:[%s384 + $0x58] sm:$0xff]
    %v397 = vld [vmem:[%s384 + $0x60] sm:$0xff]
    %v398 = vld [vmem:[%s384 + $0x68] sm:$0xff]
    %v399 = vld [vmem:[%s384 + $0x70] sm:$0xff]
    %v400 = vld [vmem:[%s384 + $0x78] sm:$0xff]
    %401 = vmatpush.msra.mxu0 %v400
    %402 = vmatpush.msra.mxu0 %v399
    %403 = vmatpush.msra.mxu0 %v398
    %404 = vmatpush.msra.mxu0 %v397
    %405 = vmatpush.msra.mxu0 %v396
    %406 = vmatpush.msra.mxu0 %v395
    %407 = vmatpush.msra.mxu0 %v394
    %408 = vmatpush.msra.mxu0 %v393
    %409 = vmatpush.msra.mxu0 %v392
    %410 = vmatpush.msra.mxu0 %v391
    %411 = vmatpush.msra.mxu0 %v390
    %412 = vmatpush.msra.mxu0 %v389
    %413 = vmatpush.msra.mxu0 %v388
    %414 = vmatpush.msra.mxu0 %v387
    %415 = vmatpush.msra.mxu0 %v386
    %416 = vmatpush.msra.mxu0 %v385
    %417 = vmatmul.f32.gmra.mxu0 %v150
    %v418 = vpop.f32.mrf.mxu0
    %v419 = vadd.f32 0.0, %v418
    %420 = vmatmul.f32.gmra.mxu0 %v151
    %v421 = vpop.f32.mrf.mxu0
    %v422 = vadd.f32 0.0, %v421
    %423 = vdwg.mxu0
    %v425 = vsel %vm235, %v146, 0
    %v428 = vsel %vm235, %v147, 0
    %430 = vmatpush.msra.mxu0 0.0
    %431 = vmatpush.msra.mxu0 0.0
    %432 = vmatpush.msra.mxu0 0.0
    %433 = vmatpush.msra.mxu0 0.0
    %434 = vmatpush.msra.mxu0 0.0
    %435 = vmatpush.msra.mxu0 0.0
    %436 = vmatpush.msra.mxu0 0.0
    %437 = vmatpush.msra.mxu0 0.0
    %438 = vmatpush.msra.mxu0 0.0
    %439 = vmatpush.msra.mxu0 0.0
    %440 = vmatpush.msra.mxu0 0.0
    %441 = vmatpush.msra.mxu0 0.0
    %442 = vmatpush.msra.mxu0 0.0
    %443 = vmatpush.msra.mxu0 0.0
    %444 = vmatpush.msra.mxu0 %v422
    %445 = vmatpush.msra.mxu0 %v419
    %446 = vmatmul.f32.gmra.mxu0 %v425
    %v447 = vpop.f32.mrf.mxu0
    %v448 = vadd.f32 0.0, %v447
    %449 = vmatmul.f32.gmra.mxu0 %v428
    %v450 = vpop.f32.mrf.mxu0
    %v451 = vadd.f32 0.0, %v450
    %452 = vdwg.mxu0
    %v453 = vadd.f32 %v382, %v448
    %v454 = vadd.f32 %v383, %v451
    %v455 = vmax.f32 %v453, 0.0
    %v456 = vmax.f32 %v454, 0.0
    %s457 = scalar_lea.vmem [#allocation13], 256
    %v458 = vld [vmem:[%s457] sm:$0xff]
    %v459 = vld [vmem:[%s457 + $0x8] sm:$0xff]
    %v460 = vld [vmem:[%s457 + $0x10] sm:$0xff]
    %v461 = vld [vmem:[%s457 + $0x18] sm:$0xff]
    %v462 = vld [vmem:[%s457 + $0x20] sm:$0xff]
    %v463 = vld [vmem:[%s457 + $0x28] sm:$0xff]
    %v464 = vld [vmem:[%s457 + $0x30] sm:$0xff]
    %v465 = vld [vmem:[%s457 + $0x38] sm:$0xff]
    %v466 = vld [vmem:[%s457 + $0x40] sm:$0xff]
    %v467 = vld [vmem:[%s457 + $0x48] sm:$0xff]
    %v468 = vld [vmem:[%s457 + $0x50] sm:$0xff]
    %v469 = vld [vmem:[%s457 + $0x58] sm:$0xff]
    %v470 = vld [vmem:[%s457 + $0x60] sm:$0xff]
    %v471 = vld [vmem:[%s457 + $0x68] sm:$0xff]
    %v472 = vld [vmem:[%s457 + $0x70] sm:$0xff]
    %v473 = vld [vmem:[%s457 + $0x78] sm:$0xff]
    %s474 = scalar_lea.vmem %s7, 2
    %v475 = vld [vmem:[%s474] sm:$0x1]
    %v477 = vperm.slane %v475, 0
    %479 = vmatpush.msra.mxu0 %v473
    %480 = vmatpush.msra.mxu0 %v472
    %481 = vmatpush.msra.mxu0 %v471
    %482 = vmatpush.msra.mxu0 %v470
    %483 = vmatpush.msra.mxu0 %v469
    %484 = vmatpush.msra.mxu0 %v468
    %485 = vmatpush.msra.mxu0 %v467
    %486 = vmatpush.msra.mxu0 %v466
    %487 = vmatpush.msra.mxu0 %v465
    %488 = vmatpush.msra.mxu0 %v464
    %489 = vmatpush.msra.mxu0 %v463
    %490 = vmatpush.msra.mxu0 %v462
    %491 = vmatpush.msra.mxu0 %v461
    %492 = vmatpush.msra.mxu0 %v460
    %493 = vmatpush.msra.mxu0 %v459
    %494 = vmatpush.msra.mxu0 %v458
    %495 = vmatmul.f32.gmra.mxu0 %v267
    %v496 = vpop.f32.mrf.mxu0
    %v497 = vadd.f32 %v477, %v496
    %498 = vmatmul.f32.gmra.mxu0 %v268
    %v499 = vpop.f32.mrf.mxu0
    %v500 = vadd.f32 %v477, %v499
    %501 = vdwg.mxu0
    %s502 = scalar_lea.vmem [#allocation11], 512
    %v503 = vld [vmem:[%s502] sm:$0xff]
    %v504 = vld [vmem:[%s502 + $0x8] sm:$0xff]
    %v505 = vld [vmem:[%s502 + $0x10] sm:$0xff]
    %v506 = vld [vmem:[%s502 + $0x18] sm:$0xff]
    %v507 = vld [vmem:[%s502 + $0x20] sm:$0xff]
    %v508 = vld [vmem:[%s502 + $0x28] sm:$0xff]
    %v509 = vld [vmem:[%s502 + $0x30] sm:$0xff]
    %v510 = vld [vmem:[%s502 + $0x38] sm:$0xff]
    %v511 = vld [vmem:[%s502 + $0x40] sm:$0xff]
    %v512 = vld [vmem:[%s502 + $0x48] sm:$0xff]
    %v513 = vld [vmem:[%s502 + $0x50] sm:$0xff]
    %v514 = vld [vmem:[%s502 + $0x58] sm:$0xff]
    %v515 = vld [vmem:[%s502 + $0x60] sm:$0xff]
    %v516 = vld [vmem:[%s502 + $0x68] sm:$0xff]
    %v517 = vld [vmem:[%s502 + $0x70] sm:$0xff]
    %v518 = vld [vmem:[%s502 + $0x78] sm:$0xff]
    %519 = vmatpush.msra.mxu0 %v518
    %520 = vmatpush.msra.mxu0 %v517
    %521 = vmatpush.msra.mxu0 %v516
    %522 = vmatpush.msra.mxu0 %v515
    %523 = vmatpush.msra.mxu0 %v514
    %524 = vmatpush.msra.mxu0 %v513
    %525 = vmatpush.msra.mxu0 %v512
    %526 = vmatpush.msra.mxu0 %v511
    %527 = vmatpush.msra.mxu0 %v510
    %528 = vmatpush.msra.mxu0 %v509
    %529 = vmatpush.msra.mxu0 %v508
    %530 = vmatpush.msra.mxu0 %v507
    %531 = vmatpush.msra.mxu0 %v506
    %532 = vmatpush.msra.mxu0 %v505
    %533 = vmatpush.msra.mxu0 %v504
    %534 = vmatpush.msra.mxu0 %v503
    %535 = vmatmul.f32.gmra.mxu0 %v455
    %v536 = vpop.f32.mrf.mxu0
    %v537 = vadd.f32 0.0, %v536
    %538 = vmatmul.f32.gmra.mxu0 %v456
    %v539 = vpop.f32.mrf.mxu0
    %v540 = vadd.f32 0.0, %v539
    %541 = vdwg.mxu0
    %542 = vmatpush.msra.mxu0 0.0
    %543 = vmatpush.msra.mxu0 0.0
    %544 = vmatpush.msra.mxu0 0.0
    %545 = vmatpush.msra.mxu0 0.0
    %546 = vmatpush.msra.mxu0 0.0
    %547 = vmatpush.msra.mxu0 0.0
    %548 = vmatpush.msra.mxu0 0.0
    %549 = vmatpush.msra.mxu0 0.0
    %550 = vmatpush.msra.mxu0 0.0
    %551 = vmatpush.msra.mxu0 0.0
    %552 = vmatpush.msra.mxu0 0.0
    %553 = vmatpush.msra.mxu0 0.0
    %554 = vmatpush.msra.mxu0 0.0
    %555 = vmatpush.msra.mxu0 0.0
    %556 = vmatpush.msra.mxu0 %v540
    %557 = vmatpush.msra.mxu0 %v537
    %558 = vmatmul.f32.gmra.mxu0 %v237
    %v559 = vpop.f32.mrf.mxu0
    %v560 = vadd.f32 0.0, %v559
    %561 = vmatmul.f32.gmra.mxu0 %v240
    %v562 = vpop.f32.mrf.mxu0
    %v563 = vadd.f32 0.0, %v562
    %564 = vdwg.mxu0
    %v565 = vadd.f32 %v497, %v560
    %v566 = vadd.f32 %v500, %v563
    %v567 = vmax.f32 %v565, 0.0
    %v568 = vmax.f32 %v566, 0.0
    %s569 = scalar_lea.vmem [#allocation13], 384
    %v570 = vld [vmem:[%s569] sm:$0xff]
    %v571 = vld [vmem:[%s569 + $0x8] sm:$0xff]
    %v572 = vld [vmem:[%s569 + $0x10] sm:$0xff]
    %v573 = vld [vmem:[%s569 + $0x18] sm:$0xff]
    %v574 = vld [vmem:[%s569 + $0x20] sm:$0xff]
    %v575 = vld [vmem:[%s569 + $0x28] sm:$0xff]
    %v576 = vld [vmem:[%s569 + $0x30] sm:$0xff]
    %v577 = vld [vmem:[%s569 + $0x38] sm:$0xff]
    %v578 = vld [vmem:[%s569 + $0x40] sm:$0xff]
    %v579 = vld [vmem:[%s569 + $0x48] sm:$0xff]
    %v580 = vld [vmem:[%s569 + $0x50] sm:$0xff]
    %v581 = vld [vmem:[%s569 + $0x58] sm:$0xff]
    %v582 = vld [vmem:[%s569 + $0x60] sm:$0xff]
    %v583 = vld [vmem:[%s569 + $0x68] sm:$0xff]
    %v584 = vld [vmem:[%s569 + $0x70] sm:$0xff]
    %v585 = vld [vmem:[%s569 + $0x78] sm:$0xff]
    %s586 = scalar_lea.vmem %s7, 3
    %v587 = vld [vmem:[%s586] sm:$0x1]
    %v589 = vperm.slane %v587, 0
    %591 = vmatpush.msra.mxu0 %v585
    %592 = vmatpush.msra.mxu0 %v584
    %593 = vmatpush.msra.mxu0 %v583
    %594 = vmatpush.msra.mxu0 %v582
    %595 = vmatpush.msra.mxu0 %v581
    %596 = vmatpush.msra.mxu0 %v580
    %597 = vmatpush.msra.mxu0 %v579
    %598 = vmatpush.msra.mxu0 %v578
    %599 = vmatpush.msra.mxu0 %v577
    %600 = vmatpush.msra.mxu0 %v576
    %601 = vmatpush.msra.mxu0 %v575
    %602 = vmatpush.msra.mxu0 %v574
    %603 = vmatpush.msra.mxu0 %v573
    %604 = vmatpush.msra.mxu0 %v572
    %605 = vmatpush.msra.mxu0 %v571
    %606 = vmatpush.msra.mxu0 %v570
    %607 = vmatmul.f32.gmra.mxu0 %v455
    %v608 = vpop.f32.mrf.mxu0
    %v609 = vadd.f32 %v589, %v608
    %610 = vmatmul.f32.gmra.mxu0 %v456
    %v611 = vpop.f32.mrf.mxu0
    %v612 = vadd.f32 %v589, %v611
    %613 = vdwg.mxu0
    %s614 = scalar_lea.vmem [#allocation11], 384
    %v615 = vld [vmem:[%s614] sm:$0xff]
    %v616 = vld [vmem:[%s614 + $0x8] sm:$0xff]
    %v617 = vld [vmem:[%s614 + $0x10] sm:$0xff]
    %v618 = vld [vmem:[%s614 + $0x18] sm:$0xff]
    %v619 = vld [vmem:[%s614 + $0x20] sm:$0xff]
    %v620 = vld [vmem:[%s614 + $0x28] sm:$0xff]
    %v621 = vld [vmem:[%s614 + $0x30] sm:$0xff]
    %v622 = vld [vmem:[%s614 + $0x38] sm:$0xff]
    %v623 = vld [vmem:[%s614 + $0x40] sm:$0xff]
    %v624 = vld [vmem:[%s614 + $0x48] sm:$0xff]
    %v625 = vld [vmem:[%s614 + $0x50] sm:$0xff]
    %v626 = vld [vmem:[%s614 + $0x58] sm:$0xff]
    %v627 = vld [vmem:[%s614 + $0x60] sm:$0xff]
    %v628 = vld [vmem:[%s614 + $0x68] sm:$0xff]
    %v629 = vld [vmem:[%s614 + $0x70] sm:$0xff]
    %v630 = vld [vmem:[%s614 + $0x78] sm:$0xff]
    %631 = vmatpush.msra.mxu0 %v630
    %632 = vmatpush.msra.mxu0 %v629
    %633 = vmatpush.msra.mxu0 %v628
    %634 = vmatpush.msra.mxu0 %v627
    %635 = vmatpush.msra.mxu0 %v626
    %636 = vmatpush.msra.mxu0 %v625
    %637 = vmatpush.msra.mxu0 %v624
    %638 = vmatpush.msra.mxu0 %v623
    %639 = vmatpush.msra.mxu0 %v622
    %640 = vmatpush.msra.mxu0 %v621
    %641 = vmatpush.msra.mxu0 %v620
    %642 = vmatpush.msra.mxu0 %v619
    %643 = vmatpush.msra.mxu0 %v618
    %644 = vmatpush.msra.mxu0 %v617
    %645 = vmatpush.msra.mxu0 %v616
    %646 = vmatpush.msra.mxu0 %v615
    %647 = vmatmul.f32.gmra.mxu0 %v267
    %v648 = vpop.f32.mrf.mxu0
    %v649 = vadd.f32 0.0, %v648
    %650 = vmatmul.f32.gmra.mxu0 %v268
    %v651 = vpop.f32.mrf.mxu0
    %v652 = vadd.f32 0.0, %v651
    %653 = vdwg.mxu0
    %654 = vmatpush.msra.mxu0 0.0
    %655 = vmatpush.msra.mxu0 0.0
    %656 = vmatpush.msra.mxu0 0.0
    %657 = vmatpush.msra.mxu0 0.0
    %658 = vmatpush.msra.mxu0 0.0
    %659 = vmatpush.msra.mxu0 0.0
    %660 = vmatpush.msra.mxu0 0.0
    %661 = vmatpush.msra.mxu0 0.0
    %662 = vmatpush.msra.mxu0 0.0
    %663 = vmatpush.msra.mxu0 0.0
    %664 = vmatpush.msra.mxu0 0.0
    %665 = vmatpush.msra.mxu0 0.0
    %666 = vmatpush.msra.mxu0 0.0
    %667 = vmatpush.msra.mxu0 0.0
    %668 = vmatpush.msra.mxu0 %v652
    %669 = vmatpush.msra.mxu0 %v649
    %670 = vmatmul.f32.gmra.mxu0 %v354
    %v671 = vpop.f32.mrf.mxu0
    %v672 = vadd.f32 0.0, %v671
    %673 = vmatmul.f32.gmra.mxu0 %v357
    %v674 = vpop.f32.mrf.mxu0
    %v675 = vadd.f32 0.0, %v674
    %676 = vdwg.mxu0
    %v677 = vadd.f32 %v609, %v672
    %v678 = vadd.f32 %v612, %v675
    %s679 = scalar_lea.vmem [#allocation11], 640
    %v680 = vld [vmem:[%s679] sm:$0xff]
    %v681 = vld [vmem:[%s679 + $0x8] sm:$0xff]
    %v682 = vld [vmem:[%s679 + $0x10] sm:$0xff]
    %v683 = vld [vmem:[%s679 + $0x18] sm:$0xff]
    %v684 = vld [vmem:[%s679 + $0x20] sm:$0xff]
    %v685 = vld [vmem:[%s679 + $0x28] sm:$0xff]
    %v686 = vld [vmem:[%s679 + $0x30] sm:$0xff]
    %v687 = vld [vmem:[%s679 + $0x38] sm:$0xff]
    %v688 = vld [vmem:[%s679 + $0x40] sm:$0xff]
    %v689 = vld [vmem:[%s679 + $0x48] sm:$0xff]
    %v690 = vld [vmem:[%s679 + $0x50] sm:$0xff]
    %v691 = vld [vmem:[%s679 + $0x58] sm:$0xff]
    %v692 = vld [vmem:[%s679 + $0x60] sm:$0xff]
    %v693 = vld [vmem:[%s679 + $0x68] sm:$0xff]
    %v694 = vld [vmem:[%s679 + $0x70] sm:$0xff]
    %v695 = vld [vmem:[%s679 + $0x78] sm:$0xff]
    %696 = vmatpush.msra.mxu0 %v695
    %697 = vmatpush.msra.mxu0 %v694
    %698 = vmatpush.msra.mxu0 %v693
    %699 = vmatpush.msra.mxu0 %v692
    %700 = vmatpush.msra.mxu0 %v691
    %701 = vmatpush.msra.mxu0 %v690
    %702 = vmatpush.msra.mxu0 %v689
    %703 = vmatpush.msra.mxu0 %v688
    %704 = vmatpush.msra.mxu0 %v687
    %705 = vmatpush.msra.mxu0 %v686
    %706 = vmatpush.msra.mxu0 %v685
    %707 = vmatpush.msra.mxu0 %v684
    %708 = vmatpush.msra.mxu0 %v683
    %709 = vmatpush.msra.mxu0 %v682
    %710 = vmatpush.msra.mxu0 %v681
    %711 = vmatpush.msra.mxu0 %v680
    %712 = vmatmul.f32.gmra.mxu0 %v455
    %v713 = vpop.f32.mrf.mxu0
    %v714 = vadd.f32 0.0, %v713
    %715 = vmatmul.f32.gmra.mxu0 %v456
    %v716 = vpop.f32.mrf.mxu0
    %v717 = vadd.f32 0.0, %v716
    %718 = vdwg.mxu0
    %719 = vmatpush.msra.mxu0 0.0
    %720 = vmatpush.msra.mxu0 0.0
    %721 = vmatpush.msra.mxu0 0.0
    %722 = vmatpush.msra.mxu0 0.0
    %723 = vmatpush.msra.mxu0 0.0
    %724 = vmatpush.msra.mxu0 0.0
    %725 = vmatpush.msra.mxu0 0.0
    %726 = vmatpush.msra.mxu0 0.0
    %727 = vmatpush.msra.mxu0 0.0
    %728 = vmatpush.msra.mxu0 0.0
    %729 = vmatpush.msra.mxu0 0.0
    %730 = vmatpush.msra.mxu0 0.0
    %731 = vmatpush.msra.mxu0 0.0
    %732 = vmatpush.msra.mxu0 0.0
    %733 = vmatpush.msra.mxu0 %v717
    %734 = vmatpush.msra.mxu0 %v714
    %735 = vmatmul.f32.gmra.mxu0 %v425
    %v736 = vpop.f32.mrf.mxu0
    %v737 = vadd.f32 0.0, %v736
    %738 = vmatmul.f32.gmra.mxu0 %v428
    %v739 = vpop.f32.mrf.mxu0
    %v740 = vadd.f32 0.0, %v739
    %741 = vdwg.mxu0
    %v742 = vadd.f32 %v677, %v737
    %v743 = vadd.f32 %v678, %v740
    %v744 = vmax.f32 %v742, 0.0
    %v745 = vmax.f32 %v743, 0.0
    %s746 = scalar_lea.vmem [#allocation13], 512
    %v747 = vld [vmem:[%s746] sm:$0xff]
    %v748 = vld [vmem:[%s746 + $0x8] sm:$0xff]
    %v749 = vld [vmem:[%s746 + $0x10] sm:$0xff]
    %v750 = vld [vmem:[%s746 + $0x18] sm:$0xff]
    %v751 = vld [vmem:[%s746 + $0x20] sm:$0xff]
    %v752 = vld [vmem:[%s746 + $0x28] sm:$0xff]
    %v753 = vld [vmem:[%s746 + $0x30] sm:$0xff]
    %v754 = vld [vmem:[%s746 + $0x38] sm:$0xff]
    %v755 = vld [vmem:[%s746 + $0x40] sm:$0xff]
    %v756 = vld [vmem:[%s746 + $0x48] sm:$0xff]
    %v757 = vld [vmem:[%s746 + $0x50] sm:$0xff]
    %v758 = vld [vmem:[%s746 + $0x58] sm:$0xff]
    %v759 = vld [vmem:[%s746 + $0x60] sm:$0xff]
    %v760 = vld [vmem:[%s746 + $0x68] sm:$0xff]
    %v761 = vld [vmem:[%s746 + $0x70] sm:$0xff]
    %v762 = vld [vmem:[%s746 + $0x78] sm:$0xff]
    %s763 = scalar_lea.vmem %s7, 4
    %v764 = vld [vmem:[%s763] sm:$0x1]
    %v766 = vperm.slane %v764, 0
    %768 = vmatpush.msra.mxu0 %v762
    %769 = vmatpush.msra.mxu0 %v761
    %770 = vmatpush.msra.mxu0 %v760
    %771 = vmatpush.msra.mxu0 %v759
    %772 = vmatpush.msra.mxu0 %v758
    %773 = vmatpush.msra.mxu0 %v757
    %774 = vmatpush.msra.mxu0 %v756
    %775 = vmatpush.msra.mxu0 %v755
    %776 = vmatpush.msra.mxu0 %v754
    %777 = vmatpush.msra.mxu0 %v753
    %778 = vmatpush.msra.mxu0 %v752
    %779 = vmatpush.msra.mxu0 %v751
    %780 = vmatpush.msra.mxu0 %v750
    %781 = vmatpush.msra.mxu0 %v749
    %782 = vmatpush.msra.mxu0 %v748
    %783 = vmatpush.msra.mxu0 %v747
    %784 = vmatmul.f32.gmra.mxu0 %v567
    %v785 = vpop.f32.mrf.mxu0
    %v786 = vadd.f32 %v766, %v785
    %787 = vmatmul.f32.gmra.mxu0 %v568
    %v788 = vpop.f32.mrf.mxu0
    %v789 = vadd.f32 %v766, %v788
    %790 = vdwg.mxu0
    %s791 = scalar_lea.vmem [#allocation11], 896
    %v792 = vld [vmem:[%s791] sm:$0xff]
    %v793 = vld [vmem:[%s791 + $0x8] sm:$0xff]
    %v794 = vld [vmem:[%s791 + $0x10] sm:$0xff]
    %v795 = vld [vmem:[%s791 + $0x18] sm:$0xff]
    %v796 = vld [vmem:[%s791 + $0x20] sm:$0xff]
    %v797 = vld [vmem:[%s791 + $0x28] sm:$0xff]
    %v798 = vld [vmem:[%s791 + $0x30] sm:$0xff]
    %v799 = vld [vmem:[%s791 + $0x38] sm:$0xff]
    %v800 = vld [vmem:[%s791 + $0x40] sm:$0xff]
    %v801 = vld [vmem:[%s791 + $0x48] sm:$0xff]
    %v802 = vld [vmem:[%s791 + $0x50] sm:$0xff]
    %v803 = vld [vmem:[%s791 + $0x58] sm:$0xff]
    %v804 = vld [vmem:[%s791 + $0x60] sm:$0xff]
    %v805 = vld [vmem:[%s791 + $0x68] sm:$0xff]
    %v806 = vld [vmem:[%s791 + $0x70] sm:$0xff]
    %v807 = vld [vmem:[%s791 + $0x78] sm:$0xff]
    %808 = vmatpush.msra.mxu0 %v807
    %809 = vmatpush.msra.mxu0 %v806
    %810 = vmatpush.msra.mxu0 %v805
    %811 = vmatpush.msra.mxu0 %v804
    %812 = vmatpush.msra.mxu0 %v803
    %813 = vmatpush.msra.mxu0 %v802
    %814 = vmatpush.msra.mxu0 %v801
    %815 = vmatpush.msra.mxu0 %v800
    %816 = vmatpush.msra.mxu0 %v799
    %817 = vmatpush.msra.mxu0 %v798
    %818 = vmatpush.msra.mxu0 %v797
    %819 = vmatpush.msra.mxu0 %v796
    %820 = vmatpush.msra.mxu0 %v795
    %821 = vmatpush.msra.mxu0 %v794
    %822 = vmatpush.msra.mxu0 %v793
    %823 = vmatpush.msra.mxu0 %v792
    %824 = vmatmul.f32.gmra.mxu0 %v744
    %v825 = vpop.f32.mrf.mxu0
    %v826 = vadd.f32 0.0, %v825
    %827 = vmatmul.f32.gmra.mxu0 %v745
    %v828 = vpop.f32.mrf.mxu0
    %v829 = vadd.f32 0.0, %v828
    %830 = vdwg.mxu0
    %831 = vmatpush.msra.mxu0 0.0
    %832 = vmatpush.msra.mxu0 0.0
    %833 = vmatpush.msra.mxu0 0.0
    %834 = vmatpush.msra.mxu0 0.0
    %835 = vmatpush.msra.mxu0 0.0
    %836 = vmatpush.msra.mxu0 0.0
    %837 = vmatpush.msra.mxu0 0.0
    %838 = vmatpush.msra.mxu0 0.0
    %839 = vmatpush.msra.mxu0 0.0
    %840 = vmatpush.msra.mxu0 0.0
    %841 = vmatpush.msra.mxu0 0.0
    %842 = vmatpush.msra.mxu0 0.0
    %843 = vmatpush.msra.mxu0 0.0
    %844 = vmatpush.msra.mxu0 0.0
    %845 = vmatpush.msra.mxu0 %v829
    %846 = vmatpush.msra.mxu0 %v826
    %847 = vmatmul.f32.gmra.mxu0 %v237
    %v848 = vpop.f32.mrf.mxu0
    %v849 = vadd.f32 0.0, %v848
    %850 = vmatmul.f32.gmra.mxu0 %v240
    %v851 = vpop.f32.mrf.mxu0
    %v852 = vadd.f32 0.0, %v851
    %853 = vdwg.mxu0
    %v854 = vadd.f32 %v786, %v849
    %v855 = vadd.f32 %v789, %v852
    %s856 = scalar_lea.vmem [#allocation13], 640
    %v857 = vld [vmem:[%s856] sm:$0xff]
    %v858 = vld [vmem:[%s856 + $0x8] sm:$0xff]
    %v859 = vld [vmem:[%s856 + $0x10] sm:$0xff]
    %v860 = vld [vmem:[%s856 + $0x18] sm:$0xff]
    %v861 = vld [vmem:[%s856 + $0x20] sm:$0xff]
    %v862 = vld [vmem:[%s856 + $0x28] sm:$0xff]
    %v863 = vld [vmem:[%s856 + $0x30] sm:$0xff]
    %v864 = vld [vmem:[%s856 + $0x38] sm:$0xff]
    %v865 = vld [vmem:[%s856 + $0x40] sm:$0xff]
    %v866 = vld [vmem:[%s856 + $0x48] sm:$0xff]
    %v867 = vld [vmem:[%s856 + $0x50] sm:$0xff]
    %v868 = vld [vmem:[%s856 + $0x58] sm:$0xff]
    %v869 = vld [vmem:[%s856 + $0x60] sm:$0xff]
    %v870 = vld [vmem:[%s856 + $0x68] sm:$0xff]
    %v871 = vld [vmem:[%s856 + $0x70] sm:$0xff]
    %v872 = vld [vmem:[%s856 + $0x78] sm:$0xff]
    %s873 = scalar_lea.vmem %s7, 5
    %v874 = vld [vmem:[%s873] sm:$0x1]
    %v876 = vperm.slane %v874, 0
    %878 = vmatpush.msra.mxu0 %v872
    %879 = vmatpush.msra.mxu0 %v871
    %880 = vmatpush.msra.mxu0 %v870
    %881 = vmatpush.msra.mxu0 %v869
    %882 = vmatpush.msra.mxu0 %v868
    %883 = vmatpush.msra.mxu0 %v867
    %884 = vmatpush.msra.mxu0 %v866
    %885 = vmatpush.msra.mxu0 %v865
    %886 = vmatpush.msra.mxu0 %v864
    %887 = vmatpush.msra.mxu0 %v863
    %888 = vmatpush.msra.mxu0 %v862
    %889 = vmatpush.msra.mxu0 %v861
    %890 = vmatpush.msra.mxu0 %v860
    %891 = vmatpush.msra.mxu0 %v859
    %892 = vmatpush.msra.mxu0 %v858
    %893 = vmatpush.msra.mxu0 %v857
    %894 = vmatmul.f32.gmra.mxu0 %v744
    %v895 = vpop.f32.mrf.mxu0
    %v896 = vadd.f32 %v876, %v895
    %897 = vmatmul.f32.gmra.mxu0 %v745
    %v898 = vpop.f32.mrf.mxu0
    %v899 = vadd.f32 %v876, %v898
    %900 = vdwg.mxu0
    %s901 = scalar_lea.vmem [#allocation11], 768
    %v902 = vld [vmem:[%s901] sm:$0xff]
    %v903 = vld [vmem:[%s901 + $0x8] sm:$0xff]
    %v904 = vld [vmem:[%s901 + $0x10] sm:$0xff]
    %v905 = vld [vmem:[%s901 + $0x18] sm:$0xff]
    %v906 = vld [vmem:[%s901 + $0x20] sm:$0xff]
    %v907 = vld [vmem:[%s901 + $0x28] sm:$0xff]
    %v908 = vld [vmem:[%s901 + $0x30] sm:$0xff]
    %v909 = vld [vmem:[%s901 + $0x38] sm:$0xff]
    %v910 = vld [vmem:[%s901 + $0x40] sm:$0xff]
    %v911 = vld [vmem:[%s901 + $0x48] sm:$0xff]
    %v912 = vld [vmem:[%s901 + $0x50] sm:$0xff]
    %v913 = vld [vmem:[%s901 + $0x58] sm:$0xff]
    %v914 = vld [vmem:[%s901 + $0x60] sm:$0xff]
    %v915 = vld [vmem:[%s901 + $0x68] sm:$0xff]
    %v916 = vld [vmem:[%s901 + $0x70] sm:$0xff]
    %v917 = vld [vmem:[%s901 + $0x78] sm:$0xff]
    %918 = vmatpush.msra.mxu0 %v917
    %919 = vmatpush.msra.mxu0 %v916
    %920 = vmatpush.msra.mxu0 %v915
    %921 = vmatpush.msra.mxu0 %v914
    %922 = vmatpush.msra.mxu0 %v913
    %923 = vmatpush.msra.mxu0 %v912
    %924 = vmatpush.msra.mxu0 %v911
    %925 = vmatpush.msra.mxu0 %v910
    %926 = vmatpush.msra.mxu0 %v909
    %927 = vmatpush.msra.mxu0 %v908
    %928 = vmatpush.msra.mxu0 %v907
    %929 = vmatpush.msra.mxu0 %v906
    %930 = vmatpush.msra.mxu0 %v905
    %931 = vmatpush.msra.mxu0 %v904
    %932 = vmatpush.msra.mxu0 %v903
    %933 = vmatpush.msra.mxu0 %v902
    %934 = vmatmul.f32.gmra.mxu0 %v567
    %v935 = vpop.f32.mrf.mxu0
    %v936 = vadd.f32 0.0, %v935
    %937 = vmatmul.f32.gmra.mxu0 %v568
    %v938 = vpop.f32.mrf.mxu0
    %v939 = vadd.f32 0.0, %v938
    %940 = vdwg.mxu0
    %941 = vmatpush.msra.mxu0 0.0
    %942 = vmatpush.msra.mxu0 0.0
    %943 = vmatpush.msra.mxu0 0.0
    %944 = vmatpush.msra.mxu0 0.0
    %945 = vmatpush.msra.mxu0 0.0
    %946 = vmatpush.msra.mxu0 0.0
    %947 = vmatpush.msra.mxu0 0.0
    %948 = vmatpush.msra.mxu0 0.0
    %949 = vmatpush.msra.mxu0 0.0
    %950 = vmatpush.msra.mxu0 0.0
    %951 = vmatpush.msra.mxu0 0.0
    %952 = vmatpush.msra.mxu0 0.0
    %953 = vmatpush.msra.mxu0 0.0
    %954 = vmatpush.msra.mxu0 0.0
    %955 = vmatpush.msra.mxu0 %v939
    %956 = vmatpush.msra.mxu0 %v936
    %957 = vmatmul.f32.gmra.mxu0 %v354
    %v958 = vpop.f32.mrf.mxu0
    %v959 = vadd.f32 0.0, %v958
    %960 = vmatmul.f32.gmra.mxu0 %v357
    %v961 = vpop.f32.mrf.mxu0
    %v962 = vadd.f32 0.0, %v961
    %963 = vdwg.mxu0
    %v964 = vadd.f32 %v896, %v959
    %v965 = vadd.f32 %v899, %v962
    %s966 = scalar_lea.vmem [#allocation11], 1024
    %v967 = vld [vmem:[%s966] sm:$0xff]
    %v968 = vld [vmem:[%s966 + $0x8] sm:$0xff]
    %v969 = vld [vmem:[%s966 + $0x10] sm:$0xff]
    %v970 = vld [vmem:[%s966 + $0x18] sm:$0xff]
    %v971 = vld [vmem:[%s966 + $0x20] sm:$0xff]
    %v972 = vld [vmem:[%s966 + $0x28] sm:$0xff]
    %v973 = vld [vmem:[%s966 + $0x30] sm:$0xff]
    %v974 = vld [vmem:[%s966 + $0x38] sm:$0xff]
    %v975 = vld [vmem:[%s966 + $0x40] sm:$0xff]
    %v976 = vld [vmem:[%s966 + $0x48] sm:$0xff]
    %v977 = vld [vmem:[%s966 + $0x50] sm:$0xff]
    %v978 = vld [vmem:[%s966 + $0x58] sm:$0xff]
    %v979 = vld [vmem:[%s966 + $0x60] sm:$0xff]
    %v980 = vld [vmem:[%s966 + $0x68] sm:$0xff]
    %v981 = vld [vmem:[%s966 + $0x70] sm:$0xff]
    %v982 = vld [vmem:[%s966 + $0x78] sm:$0xff]
    %983 = vmatpush.msra.mxu0 %v982
    %984 = vmatpush.msra.mxu0 %v981
    %985 = vmatpush.msra.mxu0 %v980
    %986 = vmatpush.msra.mxu0 %v979
    %987 = vmatpush.msra.mxu0 %v978
    %988 = vmatpush.msra.mxu0 %v977
    %989 = vmatpush.msra.mxu0 %v976
    %990 = vmatpush.msra.mxu0 %v975
    %991 = vmatpush.msra.mxu0 %v974
    %992 = vmatpush.msra.mxu0 %v973
    %993 = vmatpush.msra.mxu0 %v972
    %994 = vmatpush.msra.mxu0 %v971
    %995 = vmatpush.msra.mxu0 %v970
    %996 = vmatpush.msra.mxu0 %v969
    %997 = vmatpush.msra.mxu0 %v968
    %998 = vmatpush.msra.mxu0 %v967
    %999 = vmatmul.f32.gmra.mxu0 %v744
    %v1000 = vpop.f32.mrf.mxu0
    %v1001 = vadd.f32 0.0, %v1000
    %1002 = vmatmul.f32.gmra.mxu0 %v745
    %v1003 = vpop.f32.mrf.mxu0
    %v1004 = vadd.f32 0.0, %v1003
    %1005 = vdwg.mxu0
    %1006 = vmatpush.msra.mxu0 0.0
    %1007 = vmatpush.msra.mxu0 0.0
    %1008 = vmatpush.msra.mxu0 0.0
    %1009 = vmatpush.msra.mxu0 0.0
    %1010 = vmatpush.msra.mxu0 0.0
    %1011 = vmatpush.msra.mxu0 0.0
    %1012 = vmatpush.msra.mxu0 0.0
    %1013 = vmatpush.msra.mxu0 0.0
    %1014 = vmatpush.msra.mxu0 0.0
    %1015 = vmatpush.msra.mxu0 0.0
    %1016 = vmatpush.msra.mxu0 0.0
    %1017 = vmatpush.msra.mxu0 0.0
    %1018 = vmatpush.msra.mxu0 0.0
    %1019 = vmatpush.msra.mxu0 0.0
    %1020 = vmatpush.msra.mxu0 %v1004
    %1021 = vmatpush.msra.mxu0 %v1001
    %1022 = vmatmul.f32.gmra.mxu0 %v425
    %v1023 = vpop.f32.mrf.mxu0
    %v1024 = vadd.f32 0.0, %v1023
    %1025 = vmatmul.f32.gmra.mxu0 %v428
    %v1026 = vpop.f32.mrf.mxu0
    %v1027 = vadd.f32 0.0, %v1026
    %1028 = vdwg.mxu0
    %v1029 = vadd.f32 %v964, %v1024
    %v1030 = vadd.f32 %v965, %v1027
    %1031 = vst [vmem:[#allocation14] sm:$0xff] %v854
    %1032 = vst [vmem:[#allocation14 + $0x8] sm:$0xff] %v855
    %1033 = vst [vmem:[#allocation15] sm:$0xff] %v1029
    %1034 = vst [vmem:[#allocation15 + $0x8] sm:$0xff] %v1030
    // Predicated region
    $region62: #{tpu_custom_call.1} parent=1 // pred_check
      _
    $region63: #{tpu_custom_call.1} parent=1 // pred_check_branch
      %1036 = sbr.rel (0) target = $region65
    $region64: #{tpu_custom_call.1} parent=1 // pred_region
      %1038 = vsyncadd [#allocation4], 0
      %s1039 = sshll.u32 [#allocation14], 4
      %s1040 = int_to_ptr.vmem [resolvable:$true] %s1039
      %s1041 = sshll.u32 %s8, 4
      %s1042 = int_to_ptr.hbm [resolvable:$true] %s1041
      %1047 = dma.vmem_to_hbm [thread:$0]  %s1040, 256, %s1042, [#allocation4], 128, 128, 8
    $region65: #{tpu_custom_call.1} parent=1 // pred_fallthru
      _
    // Predicated region
    $region66: #{tpu_custom_call.1} parent=1 // pred_check
      _
    $region67: #{tpu_custom_call.1} parent=1 // pred_check_branch
      %1049 = sbr.rel (0) target = $region69
    $region68: #{tpu_custom_call.1} parent=1 // pred_region
      %1051 = vsyncadd [#allocation16], 0
      %s1052 = sshll.u32 [#allocation15], 4
      %s1053 = int_to_ptr.vmem [resolvable:$true] %s1052
      %s1054 = sshll.u32 %s9, 4
      %s1055 = int_to_ptr.hbm [resolvable:$true] %s1054
      %1060 = dma.vmem_to_hbm [thread:$0]  %s1053, 256, %s1055, [#allocation16], 128, 128, 8
    $region69: #{tpu_custom_call.1} parent=1 // pred_fallthru
      _
    // Predicated region
    $region70: #{tpu_custom_call.1} parent=1 // pred_check
      _
    $region71: #{tpu_custom_call.1} parent=1 // pred_check_branch
      %1062 = sbr.rel (0) target = $region73
    $region72: #{tpu_custom_call.1} parent=1 // pred_region
      %1064 = dma.done [#allocation4], 256
    $region73: #{tpu_custom_call.1} parent=1 // pred_fallthru
      _
    // Predicated region
    $region74: #{tpu_custom_call.1} parent=1 // pred_check
      _
    $region75: #{tpu_custom_call.1} parent=1 // pred_check_branch
      %1066 = sbr.rel (0) target = $region77
    $region76: #{tpu_custom_call.1} parent=1 // pred_region
      %1068 = dma.done [#allocation16], 256
    $region77: #{tpu_custom_call.1} parent=1 // pred_fallthru
      _
    %1069 = vsyncpa [#allocation3], 1
    %1070 = vsyncpa [#allocation6], 1
    %1071 = vsyncpa [#allocation9], 1
    %1072 = vsyncpa [#allocation12], 1
    %1073 = vsyncpa [#allocation4], 1
    %1074 = vsyncpa [#allocation16], 1

</llo_original>
